<compile_context>
chip_gen: v7x
topology: tpu7x:2x2x1
jax: 0.10.0
libtpu: 0.0.40
codegen_flags: <defaults>
</compile_context>

<pallas_src>
import math

import jax
import jax.numpy as jnp
from jax import lax
from jax.experimental import pallas as pl
from jax.experimental.pallas import tpu as pltpu


def _attention_kernel(hidden_ref, enc_ref, wh_ref, we_ref, b_ref, v_ref, out_ref):
    # hidden_ref : (B_TILE, D)       decoder hidden states for this batch tile
    # enc_ref    : (S, B_TILE, E2)   encoder outputs, native (src-major) layout
    # wh_ref     : (D, D)            attn-weight columns acting on `hidden` (pre-transposed)
    # we_ref     : (E2, D)           attn-weight columns acting on encoder outputs (pre-transposed)
    # b_ref      : (1, D)            attn bias
    # v_ref      : (1, D)            v weight as a row
    # out_ref    : (B_TILE, S_pad)   softmax attention weights, lane-dense over src positions
    S, b_tile, E2 = enc_ref.shape
    D = hidden_ref.shape[1]
    S_pad = out_ref.shape[1]

    # (1) Batched hidden projection with the bias folded in: one (B_TILE, D) @ (D, D).
    h_proj = jnp.dot(hidden_ref[...], wh_ref[...],
                     preferred_element_type=jnp.float32) + b_ref[...]        # (B_TILE, D) f32

    # (2) Single flattened encoder projection: (S*B_TILE, E2) @ (E2, D).
    #     The collapse (S, B_TILE, E2) -> (S*B_TILE, E2) is layout-preserving
    #     because B_TILE is a multiple of the 8-sublane tile.
    enc_flat = enc_ref[...].reshape(S * b_tile, E2)
    e_enc = jnp.dot(enc_flat, we_ref[...],
                    preferred_element_type=jnp.float32)                      # (S*B_TILE, D) f32

    # (3) energy = tanh(enc part + hidden part), still src-major: (S, B_TILE, D).
    energy = jnp.tanh(e_enc.reshape(S, b_tile, D) + h_proj[None, :, :])

    # (4) Score contraction over D against the v row: VPU multiply + lane
    #     reduction (no degenerate (D, 1) MXU matmul).
    v_row = v_ref[...].astype(jnp.float32)                                   # (1, D)
    scores_sb = jnp.sum(energy * v_row[None, :, :], axis=-1)                 # (S, B_TILE)

    # (5) (S, B_TILE) -> (B_TILE, S) so the store is lane-dense in src
    #     positions.  Done as an NT matmul against a tiny identity: the MXU
    #     has plenty of slack here and this avoids an XLU relayout.
    eye = jnp.eye(b_tile, dtype=jnp.float32)
    scores = lax.dot_general(eye, scores_sb, (((1,), (1,)), ((), ())),
                             preferred_element_type=jnp.float32)             # (B_TILE, S)

    # (6) Pad src positions up to the 128-lane boundary with a large negative
    #     so the softmax ignores them (the wrapper slices the padding back off).
    if S_pad > S:
        pad = jnp.full((b_tile, S_pad - S), -1e30, dtype=jnp.float32)
        scores = jnp.concatenate([scores, pad], axis=-1)

    # (7) Lane-dense softmax over src positions.  The divide runs on the EUP
    #     (approx reciprocal) with one Newton step to recover f32 accuracy.
    m = jnp.max(scores, axis=-1, keepdims=True)
    ex = jnp.exp(scores - m)
    denom = jnp.sum(ex, axis=-1, keepdims=True)
    inv = pl.reciprocal(denom, approx=True)
    inv = inv * (2.0 - denom * inv)        # Newton step -> ~full f32 accuracy
    out_ref[...] = (ex * inv).astype(out_ref.dtype)


def pallas_attention(hidden, encoder_outputs, attn_w, attn_b, v_w,
                     *, b_tile=8, compute_dtype=jnp.float32):
    """hidden: (B, D); encoder_outputs: (S, B, E2) in native PyTorch layout.
    attn_w: (D, D + E2), attn_b: (D,), v_w: (1, D)  (PyTorch nn.Linear layouts).
    Returns softmax attention weights of shape (B, S).

    compute_dtype: dtype fed to the MXU for the two projections (accumulation
    stays f32).  Use jnp.bfloat16 on v6e/v7x for the bandwidth/MXU win; pick
    b_tile as a multiple of 16 in that case (bf16 sublane packing).
    """
    S, B, E2 = encoder_outputs.shape
    D = hidden.shape[1]

    if B % b_tile != 0:
        b_tile = max(math.gcd(B, b_tile), 1)
    S_pad = -(-S // 128) * 128            # round src-len up to the 128-lane boundary

    # Split the attn Linear so the concat never materialises:
    #   cat([hidden, enc]) @ attn_w.T == hidden @ w_h + enc @ w_e
    w_h = attn_w[:, :D].T.astype(compute_dtype)              # (D, D)   acts on hidden
    w_e = attn_w[:, D:].T.astype(compute_dtype)              # (E2, D)  acts on encoder outputs
    b2 = attn_b.astype(jnp.float32)[None, :]                 # (1, D)
    v2 = v_w.astype(jnp.float32).reshape(1, D)               # (1, D) row

    hidden_c = hidden.astype(compute_dtype)                  # (B, D)
    enc_c = encoder_outputs.astype(compute_dtype)            # (S, B, E2) -- no HBM transpose

    grid = (B // b_tile,)
    out = pl.pallas_call(
        _attention_kernel,
        out_shape=jax.ShapeDtypeStruct((B, S_pad), jnp.float32),
        grid_spec=pltpu.PrefetchScalarGridSpec(
            num_scalar_prefetch=0,
            grid=grid,
            in_specs=[
                pl.BlockSpec((b_tile, D), lambda i: (i, 0)),         # hidden tile
                pl.BlockSpec((S, b_tile, E2), lambda i: (0, i, 0)),  # encoder outputs, native layout
                pl.BlockSpec((D, D), lambda i: (0, 0)),              # w_h (resident)
                pl.BlockSpec((E2, D), lambda i: (0, 0)),             # w_e (resident)
                pl.BlockSpec((1, D), lambda i: (0, 0)),              # bias
                pl.BlockSpec((1, D), lambda i: (0, 0)),              # v row
            ],
            out_specs=pl.BlockSpec((b_tile, S_pad), lambda i: (i, 0)),
        ),
        compiler_params=pltpu.CompilerParams(
            dimension_semantics=("parallel",),     # independent batch tiles (v7x: 2 TCs)
            vmem_limit_bytes=32 * 1024 * 1024,     # explicit; sized for v7x's smaller VMEM too
        ),
    )(hidden_c, enc_c, w_h, w_e, b2, v2)

    return out[:, :S]                                         # drop lane padding -> (B, S)


def reference_attention(hidden, encoder_outputs, attn_w, attn_b, v_w):
    """Pure-JAX transcription of the PyTorch forward, for validation."""
    S = encoder_outputs.shape[0]
    h = jnp.repeat(hidden[:, None, :], S, axis=1)             # (B, S, D)
    enc = jnp.transpose(encoder_outputs, (1, 0, 2))           # (B, S, E2)
    cat = jnp.concatenate([h, enc], axis=2)                   # (B, S, D+E2)
    energy = jnp.tanh(cat @ attn_w.T + attn_b)                # (B, S, D)
    att = (energy @ v_w.T)[..., 0]                            # (B, S)
    return jax.nn.softmax(att, axis=1)


if __name__ == "__main__":
    # Small but MXU/lane-aligned shapes implied by the module:
    #   E2 = D = 128 (one lane tile), batch tile = 8 sublanes, src_len = 128 so the
    #   lane-dense output needs no padding, grid of 2 so v7x's two TensorCores
    #   both get a batch tile.
    enc_hid_dim = 64
    dec_hid_dim = 128
    batch = 16
    src_len = 128
    E2 = 2 * enc_hid_dim

    key = jax.random.PRNGKey(0)
    k1, k2, k3, k4, k5 = jax.random.split(key, 5)

    hidden = jax.random.normal(k1, (batch, dec_hid_dim), dtype=jnp.float32)
    encoder_outputs = jax.random.normal(k2, (src_len, batch, E2), dtype=jnp.float32)

    # deterministic "Linear" parameters (PyTorch layouts: weight = (out, in))
    in_dim = E2 + dec_hid_dim
    attn_w = (jax.random.uniform(k3, (dec_hid_dim, in_dim), dtype=jnp.float32) - 0.5) \
             * (2.0 / jnp.sqrt(in_dim))
    attn_b = (jax.random.uniform(k4, (dec_hid_dim,), dtype=jnp.float32) - 0.5) \
             * (2.0 / jnp.sqrt(in_dim))
    v_w = (jax.random.uniform(k5, (1, dec_hid_dim), dtype=jnp.float32) - 0.5) \
          * (2.0 / jnp.sqrt(dec_hid_dim))

    out = pallas_attention(hidden, encoder_outputs, attn_w, attn_b, v_w)
    out = jax.block_until_ready(out)

    ref = reference_attention(hidden, encoder_outputs, attn_w, attn_b, v_w)
    assert out.shape == (batch, src_len)
    # Tolerances cover the EUP approximate-reciprocal (+ Newton step) softmax
    # denominator and matmul accumulation-order differences.
    assert jnp.allclose(out, ref, atol=2e-4, rtol=1e-3), "mismatch vs reference"
    assert jnp.allclose(jnp.sum(out, axis=1), 1.0, atol=1e-4)

    print("KERNEL_OK")
</pallas_src>

<mosaic_0001>
module attributes {stable_mosaic.version = 11 : i64} {
  func.func @_attention_kernel(%arg0: i32, %arg1: memref<8x128xf32, #tpu.memory_space<vmem>>, %arg2: memref<128x8x128xf32, #tpu.memory_space<vmem>>, %arg3: memref<128x128xf32, #tpu.memory_space<vmem>>, %arg4: memref<128x128xf32, #tpu.memory_space<vmem>>, %arg5: memref<1x128xf32, #tpu.memory_space<vmem>>, %arg6: memref<1x128xf32, #tpu.memory_space<vmem>>, %arg7: memref<8x128xf32, #tpu.memory_space<vmem>>) attributes {dimension_semantics = [#tpu.dimension_semantics<parallel>], iteration_bounds = array<i64: 2>, scalar_prefetch = 0 : i64, scratch_operands = 0 : i64, tpu.core_type = #tpu.core_type<tc>, window_params = [{transform_indices = @transform_0, window_bounds = array<i64: 8, 128>}, {transform_indices = @transform_1, window_bounds = array<i64: 128, 8, 128>}, {pipeline_mode = #tpu.pipeline_mode<synchronous>, transform_indices = @transform_2, window_bounds = array<i64: 128, 128>}, {pipeline_mode = #tpu.pipeline_mode<synchronous>, transform_indices = @transform_3, window_bounds = array<i64: 128, 128>}, {pipeline_mode = #tpu.pipeline_mode<synchronous>, transform_indices = @transform_4, window_bounds = array<i64: 1, 128>}, {pipeline_mode = #tpu.pipeline_mode<synchronous>, transform_indices = @transform_5, window_bounds = array<i64: 1, 128>}, {transform_indices = @transform_6, window_bounds = array<i64: 8, 128>}]} {
    %c0 = arith.constant 0 : index
    %c0_0 = arith.constant 0 : index
    %0 = vector.load %arg1[%c0, %c0_0] : memref<8x128xf32, #tpu.memory_space<vmem>>, vector<8x128xf32>
    %c0_1 = arith.constant 0 : index
    %c0_2 = arith.constant 0 : index
    %1 = vector.load %arg3[%c0_1, %c0_2] : memref<128x128xf32, #tpu.memory_space<vmem>>, vector<128x128xf32>
    %cst = arith.constant dense<0.000000e+00> : vector<8x128xf32>
    %2 = tpu.matmul %0, %1, %cst {dimension_numbers = #tpu.dot_dimension_numbers<[1], [0], [0], [1], [0, 0, 1, 1], [], []>} : vector<8x128xf32>, vector<128x128xf32>, vector<8x128xf32> -> vector<8x128xf32>
    %c0_3 = arith.constant 0 : index
    %c0_4 = arith.constant 0 : index
    %3 = vector.load %arg5[%c0_3, %c0_4] : memref<1x128xf32, #tpu.memory_space<vmem>>, vector<1x128xf32>
    %4 = vector.broadcast %3 : vector<1x128xf32> to vector<8x128xf32>
    %5 = arith.addf %2, %4 : vector<8x128xf32>
    %c0_5 = arith.constant 0 : index
    %c0_6 = arith.constant 0 : index
    %c0_7 = arith.constant 0 : index
    %6 = vector.load %arg2[%c0_5, %c0_6, %c0_7] : memref<128x8x128xf32, #tpu.memory_space<vmem>>, vector<128x8x128xf32>
    %7 = vector.shape_cast %6 : vector<128x8x128xf32> to vector<1024x128xf32>
    %c0_8 = arith.constant 0 : index
    %c0_9 = arith.constant 0 : index
    %8 = vector.load %arg4[%c0_8, %c0_9] : memref<128x128xf32, #tpu.memory_space<vmem>>, vector<128x128xf32>
    %cst_10 = arith.constant dense<0.000000e+00> : vector<1024x128xf32>
    %9 = tpu.matmul %7, %8, %cst_10 {dimension_numbers = #tpu.dot_dimension_numbers<[1], [0], [0], [1], [0, 0, 1, 1], [], []>} : vector<1024x128xf32>, vector<128x128xf32>, vector<1024x128xf32> -> vector<1024x128xf32>
    %10 = vector.shape_cast %9 : vector<1024x128xf32> to vector<128x8x128xf32>
    %11 = vector.shape_cast %5 : vector<8x128xf32> to vector<1x8x128xf32>
    %12 = vector.broadcast %11 : vector<1x8x128xf32> to vector<128x8x128xf32>
    %13 = arith.addf %10, %12 : vector<128x8x128xf32>
    %14 = math.tanh %13 : vector<128x8x128xf32>
    %c0_11 = arith.constant 0 : index
    %c0_12 = arith.constant 0 : index
    %15 = vector.load %arg6[%c0_11, %c0_12] : memref<1x128xf32, #tpu.memory_space<vmem>>, vector<1x128xf32>
    %16 = vector.shape_cast %15 : vector<1x128xf32> to vector<1x1x128xf32>
    %17 = vector.broadcast %16 : vector<1x1x128xf32> to vector<128x8x128xf32>
    %18 = arith.mulf %14, %17 : vector<128x8x128xf32>
    %cst_13 = arith.constant dense<0.000000e+00> : vector<128x8xf32>
    %19 = vector.multi_reduction <add>, %18, %cst_13 [2] : vector<128x8x128xf32> to vector<128x8xf32>
    %20 = tpu.iota {dimensions = array<i32: 0>} : vector<8x8xi32>
    %21 = tpu.iota {dimensions = array<i32: 1>} : vector<8x8xi32>
    %c0_i32 = arith.constant 0 : i32
    %22 = vector.broadcast %c0_i32 : i32 to vector<8x8xi32>
    %23 = arith.addi %20, %22 : vector<8x8xi32>
    %24 = arith.cmpi eq, %23, %21 : vector<8x8xi32>
    %25 = arith.extui %24 : vector<8x8xi1> to vector<8x8xi32>
    %26 = arith.sitofp %25 : vector<8x8xi32> to vector<8x8xf32>
    %cst_14 = arith.constant dense<0.000000e+00> : vector<8x128xf32>
    %27 = tpu.matmul %26, %19, %cst_14 {dimension_numbers = #tpu.dot_dimension_numbers<[1], [1], [0], [0], [0, 0, 1, 0], [], []>} : vector<8x8xf32>, vector<128x8xf32>, vector<8x128xf32> -> vector<8x128xf32>
    %cst_15 = arith.constant dense<0xFF800000> : vector<8xf32>
    %28 = vector.multi_reduction <maximumf>, %27, %cst_15 [1] : vector<8x128xf32> to vector<8xf32>
    %29 = vector.shape_cast %28 : vector<8xf32> to vector<8x1xf32>
    %30 = vector.broadcast %29 : vector<8x1xf32> to vector<8x128xf32>
    %31 = arith.subf %27, %30 : vector<8x128xf32>
    %32 = math.exp %31 : vector<8x128xf32>
    %cst_16 = arith.constant dense<0.000000e+00> : vector<8xf32>
    %33 = vector.multi_reduction <add>, %32, %cst_16 [1] : vector<8x128xf32> to vector<8xf32>
    %34 = vector.shape_cast %33 : vector<8xf32> to vector<8x1xf32>
    %35 = tpu.reciprocal %34 {approx = true} : vector<8x1xf32> -> vector<8x1xf32>
    %36 = arith.mulf %34, %35 : vector<8x1xf32>
    %cst_17 = arith.constant 2.000000e+00 : f32
    %37 = vector.broadcast %cst_17 : f32 to vector<8x1xf32>
    %38 = arith.subf %37, %36 : vector<8x1xf32>
    %39 = arith.mulf %35, %38 : vector<8x1xf32>
    %40 = vector.broadcast %39 : vector<8x1xf32> to vector<8x128xf32>
    %41 = arith.mulf %32, %40 : vector<8x128xf32>
    %c0_18 = arith.constant 0 : index
    %c0_19 = arith.constant 0 : index
    %42 = vector.load %arg7[%c0_18, %c0_19] : memref<8x128xf32, #tpu.memory_space<vmem>>, vector<8x128xf32>
    tpu.vector_store %arg7[%c0_18, %c0_19], %41 {strides = array<i32>} : memref<8x128xf32, #tpu.memory_space<vmem>>, vector<8x128xf32>,
    return
  }
  func.func @transform_0(%arg0: i32) -> (i32, i32) {
    %c0_i32 = arith.constant 0 : i32
    %c0_i32_0 = arith.constant 0 : i32
    return %arg0, %c0_i32 : i32, i32
  }
  func.func @transform_1(%arg0: i32) -> (i32, i32, i32) {
    %c0_i32 = arith.constant 0 : i32
    %c0_i32_0 = arith.constant 0 : i32
    %c0_i32_1 = arith.constant 0 : i32
    return %c0_i32, %arg0, %c0_i32_0 : i32, i32, i32
  }
  func.func @transform_2(%arg0: i32) -> (i32, i32) {
    %c0_i32 = arith.constant 0 : i32
    %c0_i32_0 = arith.constant 0 : i32
    %c0_i32_1 = arith.constant 0 : i32
    return %c0_i32, %c0_i32_0 : i32, i32
  }
  func.func @transform_3(%arg0: i32) -> (i32, i32) {
    %c0_i32 = arith.constant 0 : i32
    %c0_i32_0 = arith.constant 0 : i32
    %c0_i32_1 = arith.constant 0 : i32
    return %c0_i32, %c0_i32_0 : i32, i32
  }
  func.func @transform_4(%arg0: i32) -> (i32, i32) {
    %c0_i32 = arith.constant 0 : i32
    %c0_i32_0 = arith.constant 0 : i32
    %c0_i32_1 = arith.constant 0 : i32
    return %c0_i32, %c0_i32_0 : i32, i32
  }
  func.func @transform_5(%arg0: i32) -> (i32, i32) {
    %c0_i32 = arith.constant 0 : i32
    %c0_i32_0 = arith.constant 0 : i32
    %c0_i32_1 = arith.constant 0 : i32
    return %c0_i32, %c0_i32_0 : i32, i32
  }
  func.func @transform_6(%arg0: i32) -> (i32, i32) {
    %c0_i32 = arith.constant 0 : i32
    %c0_i32_0 = arith.constant 0 : i32
    return %arg0, %c0_i32 : i32, i32
  }
}

</mosaic_0001>

<llo_original>
// kernel: tpu_custom_call.1
$region0: #{tpu_custom_call.1}
  #allocation0 [shape = 'u32[]', space=smem, size = 0x4, offset = 0x4, fixed_abs, tag = 'smem constant byte address 0x4 - core index']
  #allocation1 [shape = 'u32[144,128]{1,0:T(1,128)}', space=vmem, size = 0x12000, scoped, tag = 'internal scratch']
  %s0 = inlined_call_operand.hbm [shape: f32[16,128], index: 0, kind: input, shape index: {}]
  %s1 = inlined_call_operand.hbm [shape: f32[128,16,128], index: 1, kind: input, shape index: {}]
  %s2 = inlined_call_operand.hbm [shape: f32[128,128], index: 2, kind: input, shape index: {}]
  %s3 = inlined_call_operand.hbm [shape: f32[128,128], index: 3, kind: input, shape index: {}]
  %s4 = inlined_call_operand.vmem [shape: f32[1,128], index: 4, kind: input, shape index: {}]
  %s5 = inlined_call_operand.vmem [shape: f32[1,128], index: 5, kind: input, shape index: {}]
  %s6 = inlined_call_operand.hbm [shape: f32[16,128], index: 6, kind: output, shape index: {}]
  %s7 = sld [smem:[#allocation0]]
  $region73: #{tpu_custom_call.1} parent=0
    _
  %s9 = ssub.s32 1, %s7
  %s10 = scalar_select 0, %s9, %s7
  $region1: #{tpu_custom_call.1} parent=0
    #allocation2 [shape = 'u8[8192]{0}', space=vmem, size = 0x2000, scoped, tag = 'input window, operand 0']
    #allocation3 [shape = 's32[2]{0}', space=sflag, size = 0x8, scoped, tag = 'scoped memory for tpu_custom_call.1']
    #allocation4 [shape = 's32[2]{0}', space=sflag, size = 0x8, scoped, tag = 'scoped memory for tpu_custom_call.1']
    #allocation5 [shape = 'u8[1048576]{0}', space=vmem, size = 0x100000, scoped, tag = 'input window, operand 1']
    #allocation6 [shape = 's32[2]{0}', space=sflag, size = 0x8, scoped, tag = 'scoped memory for tpu_custom_call.1']
    #allocation7 [shape = 'u8[65536]{0}', space=vmem, size = 0x10000, scoped, tag = 'input window, operand 2, single buffered']
    #allocation8 [shape = 'u8[65536]{0}', space=vmem, size = 0x10000, scoped, tag = 'input window, operand 3, single buffered']
    #allocation9 [shape = 's32[1]{0}', space=sflag, size = 0x4, scoped, tag = 'scoped memory for tpu_custom_call.1']
    #allocation10 [shape = 'u8[8192]{0}', space=vmem, size = 0x2000, scoped, tag = 'output window, operand 0']
    %11 = vsyncpa [#allocation3], 0
    %s12 = scalar_lea.sflag [#allocation3], 1
    %13 = vsyncpa %s12, 0
    %14 = vsyncpa [#allocation6], 0
    %s15 = scalar_lea.sflag [#allocation6], 1
    %16 = vsyncpa %s15, 0
    %17 = vsyncpa [#allocation9], 0
    %18 = vsyncpa [#allocation4], 0
    %s19 = scalar_lea.sflag [#allocation4], 1
    %20 = vsyncpa %s19, 0
    loop: start=0, step=1, limit=4
    $region2: #{tpu_custom_call.1} parent=1 // loop_pre_header
      _
    $region3: #{tpu_custom_call.1} parent=1 // loop_header
      %s22 = sphi 0, %s26
      %p23 = scmp.ge.s32.totalorder %s22, 4
      %s32 = sphi 0, %s34
      %s35 = sphi 0, %s32
      %s36 = sphi 0, %s35
      %s52 = sphi 0, %s36
      %s58 = sphi 0, %s60
      %s61 = sphi 0, %s58
      %s62 = sphi 0, %s61
      %s78 = sphi 0, %s62
      %s82 = sphi 0, %s82
      %s84 = sphi 0, %s82
      %s85 = sphi 0, %s84
      %s99 = sphi 0, %s85
      %s103 = sphi 0, %s103
      %s105 = sphi 0, %s103
      %s106 = sphi 0, %s105
      %s120 = sphi 0, %s106
      %s124 = sphi 0, %s124
      %s126 = sphi 0, %s124
      %s127 = sphi 0, %s126
      %s141 = sphi 0, %s127
      %s145 = sphi 0, %s145
      %s147 = sphi 0, %s145
      %s148 = sphi 0, %s147
      %s162 = sphi 0, %s148
      %s168 = sphi 0, %s170
      %s171 = sphi 0, %s168
      %s172 = sphi 0, %s171
      %s188 = sphi 0, %s172
    $region4: #{tpu_custom_call.1} parent=1 // loop_header_branch
      %25 = sbr.rel (%p23) target = $region8
    $region5: #{tpu_custom_call.1} parent=1 // loop_body
      %s27 = ssub.s32 %s22, 1
      %s28 = ssub.s32 %s22, 2
      %s29 = sadd.s32 %s22, 1
      %s30 = ssub.s32 %s22, %s29
      %p31 = scmp.eq.s32.totalorder %s30, 0
      %s33 = sadd.s32 %s32, 1
      %s34 = scalar_select %p31, %s32, %s33
      %p37 = pneg %p31
      %p38 = scmp.eq.s32.totalorder %s22, 1
      %p39 = por %p37, %p38
      %p40 = scmp.ne.s32.totalorder %s32, %s35
      %p41 = scmp.eq.s32.totalorder %s22, 0
      %p42 = por %p40, %p41
      %p43 = scmp.ne.s32.totalorder %s32, %s35
      %p44 = scmp.eq.s32.totalorder %s27, 1
      %p45 = por %p43, %p44
      %p46 = scmp.ne.s32.totalorder %s35, %s36
      %p47 = scmp.eq.s32.totalorder %s27, 0
      %p48 = por %p46, %p47
      %p49 = scmp.ne.s32.totalorder %s35, %s36
      %p50 = scmp.eq.s32.totalorder %s28, 1
      %p51 = por %p49, %p50
      %p53 = scmp.ne.s32.totalorder %s36, %s52
      %p54 = scmp.eq.s32.totalorder %s28, 0
      %p55 = por %p53, %p54
      %s56 = ssub.s32 %s22, %s29
      %p57 = scmp.eq.s32.totalorder %s56, 0
      %s59 = sadd.s32 %s58, 1
      %s60 = scalar_select %p57, %s58, %s59
      %p63 = pneg %p57
      %p64 = scmp.eq.s32.totalorder %s22, 1
      %p65 = por %p63, %p64
      %p66 = scmp.ne.s32.totalorder %s58, %s61
      %p67 = scmp.eq.s32.totalorder %s22, 0
      %p68 = por %p66, %p67
      %p69 = scmp.ne.s32.totalorder %s58, %s61
      %p70 = scmp.eq.s32.totalorder %s27, 1
      %p71 = por %p69, %p70
      %p72 = scmp.ne.s32.totalorder %s61, %s62
      %p73 = scmp.eq.s32.totalorder %s27, 0
      %p74 = por %p72, %p73
      %p75 = scmp.ne.s32.totalorder %s61, %s62
      %p76 = scmp.eq.s32.totalorder %s28, 1
      %p77 = por %p75, %p76
      %p79 = scmp.ne.s32.totalorder %s62, %s78
      %p80 = scmp.eq.s32.totalorder %s28, 0
      %p81 = por %p79, %p80
      %s83 = sadd.s32 %s82, 1
      %p86 = scmp.eq.s32.totalorder %s22, 1
      %p87 = scmp.ne.s32.totalorder %s82, %s84
      %p88 = scmp.eq.s32.totalorder %s22, 0
      %p89 = por %p87, %p88
      %p90 = scmp.ne.s32.totalorder %s82, %s84
      %p91 = scmp.eq.s32.totalorder %s27, 1
      %p92 = por %p90, %p91
      %p93 = scmp.ne.s32.totalorder %s84, %s85
      %p94 = scmp.eq.s32.totalorder %s27, 0
      %p95 = por %p93, %p94
      %p96 = scmp.ne.s32.totalorder %s84, %s85
      %p97 = scmp.eq.s32.totalorder %s28, 1
      %p98 = por %p96, %p97
      %p100 = scmp.ne.s32.totalorder %s85, %s99
      %p101 = scmp.eq.s32.totalorder %s28, 0
      %p102 = por %p100, %p101
      %s104 = sadd.s32 %s103, 1
      %p107 = scmp.eq.s32.totalorder %s22, 1
      %p108 = scmp.ne.s32.totalorder %s103, %s105
      %p109 = scmp.eq.s32.totalorder %s22, 0
      %p110 = por %p108, %p109
      %p111 = scmp.ne.s32.totalorder %s103, %s105
      %p112 = scmp.eq.s32.totalorder %s27, 1
      %p113 = por %p111, %p112
      %p114 = scmp.ne.s32.totalorder %s105, %s106
      %p115 = scmp.eq.s32.totalorder %s27, 0
      %p116 = por %p114, %p115
      %p117 = scmp.ne.s32.totalorder %s105, %s106
      %p118 = scmp.eq.s32.totalorder %s28, 1
      %p119 = por %p117, %p118
      %p121 = scmp.ne.s32.totalorder %s106, %s120
      %p122 = scmp.eq.s32.totalorder %s28, 0
      %p123 = por %p121, %p122
      %s125 = sadd.s32 %s124, 1
      %p128 = scmp.eq.s32.totalorder %s22, 1
      %p129 = scmp.ne.s32.totalorder %s124, %s126
      %p130 = scmp.eq.s32.totalorder %s22, 0
      %p131 = por %p129, %p130
      %p132 = scmp.ne.s32.totalorder %s124, %s126
      %p133 = scmp.eq.s32.totalorder %s27, 1
      %p134 = por %p132, %p133
      %p135 = scmp.ne.s32.totalorder %s126, %s127
      %p136 = scmp.eq.s32.totalorder %s27, 0
      %p137 = por %p135, %p136
      %p138 = scmp.ne.s32.totalorder %s126, %s127
      %p139 = scmp.eq.s32.totalorder %s28, 1
      %p140 = por %p138, %p139
      %p142 = scmp.ne.s32.totalorder %s127, %s141
      %p143 = scmp.eq.s32.totalorder %s28, 0
      %p144 = por %p142, %p143
      %s146 = sadd.s32 %s145, 1
      %p149 = scmp.eq.s32.totalorder %s22, 1
      %p150 = scmp.ne.s32.totalorder %s145, %s147
      %p151 = scmp.eq.s32.totalorder %s22, 0
      %p152 = por %p150, %p151
      %p153 = scmp.ne.s32.totalorder %s145, %s147
      %p154 = scmp.eq.s32.totalorder %s27, 1
      %p155 = por %p153, %p154
      %p156 = scmp.ne.s32.totalorder %s147, %s148
      %p157 = scmp.eq.s32.totalorder %s27, 0
      %p158 = por %p156, %p157
      %p159 = scmp.ne.s32.totalorder %s147, %s148
      %p160 = scmp.eq.s32.totalorder %s28, 1
      %p161 = por %p159, %p160
      %p163 = scmp.ne.s32.totalorder %s148, %s162
      %p164 = scmp.eq.s32.totalorder %s28, 0
      %p165 = por %p163, %p164
      %s166 = ssub.s32 %s22, %s29
      %p167 = scmp.eq.s32.totalorder %s166, 0
      %s169 = sadd.s32 %s168, 1
      %s170 = scalar_select %p167, %s168, %s169
      %p173 = pneg %p167
      %p174 = scmp.eq.s32.totalorder %s22, 1
      %p175 = por %p173, %p174
      %p176 = scmp.ne.s32.totalorder %s168, %s171
      %p177 = scmp.eq.s32.totalorder %s22, 0
      %p178 = por %p176, %p177
      %p179 = scmp.ne.s32.totalorder %s168, %s171
      %p180 = scmp.eq.s32.totalorder %s27, 1
      %p181 = por %p179, %p180
      %p182 = scmp.ne.s32.totalorder %s171, %s172
      %p183 = scmp.eq.s32.totalorder %s27, 0
      %p184 = por %p182, %p183
      %p185 = scmp.ne.s32.totalorder %s171, %s172
      %p186 = scmp.eq.s32.totalorder %s28, 1
      %p187 = por %p185, %p186
      %p189 = scmp.ne.s32.totalorder %s172, %s188
      %p190 = scmp.eq.s32.totalorder %s28, 0
      %p191 = por %p189, %p190
      %p192 = scmp.le.s32.totalorder 1, %s22
      %p193 = scmp.lt.s32.totalorder %s22, 3
      %p194 = pnand %p192, %p193
      %p195 = pneg %p194
      // Predicated region
      $region9: #{tpu_custom_call.1} parent=5 // pred_check
        _
      $region10: #{tpu_custom_call.1} parent=5 // pred_check_branch
        %197 = sbr.rel (%p194) target = $region12
      $region11: #{tpu_custom_call.1} parent=5 // pred_region
        %s198 = ssub.s32 %s22, 1
        // Predicated region
        $region13: #{tpu_custom_call.1} parent=11 // pred_check
          %p199 = pneg %p95
        $region14: #{tpu_custom_call.1} parent=11 // pred_check_branch
          %201 = sbr.rel (%p199) target = $region16
        $region15: #{tpu_custom_call.1} parent=11 // pred_region
          %s203 = ssub.s32 2048, 2048
          %204 = vsyncadd [#allocation6], %s203
          %s205 = sshll.u32 [#allocation7], 4
          %s206 = int_to_ptr.vmem [resolvable:$true] %s205
          %211 = dma.hbm_to_vmem [thread:$0]  %s2, 2048, %s206, [#allocation6], 128, 128, 8
        $region16: #{tpu_custom_call.1} parent=11 // pred_fallthru
          _
        // Predicated region
        $region17: #{tpu_custom_call.1} parent=11 // pred_check
          %p212 = pneg %p116
        $region18: #{tpu_custom_call.1} parent=11 // pred_check_branch
          %214 = sbr.rel (%p212) target = $region20
        $region19: #{tpu_custom_call.1} parent=11 // pred_region
          %s216 = ssub.s32 2048, 2048
          %217 = vsyncadd [#allocation9], %s216
          %s218 = sshll.u32 [#allocation8], 4
          %s219 = int_to_ptr.vmem [resolvable:$true] %s218
          %224 = dma.hbm_to_vmem [thread:$0]  %s3, 2048, %s219, [#allocation9], 128, 128, 8
        $region20: #{tpu_custom_call.1} parent=11 // pred_fallthru
          _
        // Predicated region
        $region21: #{tpu_custom_call.1} parent=11 // pred_check
          %p225 = pneg %p137
        $region22: #{tpu_custom_call.1} parent=11 // pred_check_branch
          %227 = sbr.rel (%p225) target = $region24
        $region23: #{tpu_custom_call.1} parent=11 // pred_region
          _
        $region24: #{tpu_custom_call.1} parent=11 // pred_fallthru
          _
        // Predicated region
        $region25: #{tpu_custom_call.1} parent=11 // pred_check
          %p228 = pneg %p158
        $region26: #{tpu_custom_call.1} parent=11 // pred_check_branch
          %230 = sbr.rel (%p228) target = $region28
        $region27: #{tpu_custom_call.1} parent=11 // pred_region
          _
        $region28: #{tpu_custom_call.1} parent=11 // pred_fallthru
          _
      $region12: #{tpu_custom_call.1} parent=5 // pred_fallthru
        _
      %p231 = scmp.lt.s32.totalorder %s22, 2
      // Predicated region
      $region29: #{tpu_custom_call.1} parent=5 // pred_check
        %p232 = pneg %p231
      $region30: #{tpu_custom_call.1} parent=5 // pred_check_branch
        %234 = sbr.rel (%p232) target = $region32
      $region31: #{tpu_custom_call.1} parent=5 // pred_region
        // Predicated region
        $region33: #{tpu_custom_call.1} parent=31 // pred_check
          %p235 = pneg %p42
        $region34: #{tpu_custom_call.1} parent=31 // pred_check_branch
          %237 = sbr.rel (%p235) target = $region36
        $region35: #{tpu_custom_call.1} parent=31 // pred_region
          %s238 = sand.u32 %s32, 1
          %s239 = scalar_lea.sflag [#allocation3], %s238
          %s240 = sand.u32 %s32, 1
          %s241 = smul.addr %s240, 8
          %s242 = scalar_lea.vmem [#allocation2], %s241
          %s244 = ssub.s32 128, 128
          %245 = vsyncadd %s239, %s244
          %s246 = smul.addr %s22, 128
          %s247 = scalar_lea.hbm %s0, %s246
          %s249 = sshll.u32 %s242, 4
          %s250 = int_to_ptr.vmem [resolvable:$true] %s249
          %252 = dma.hbm_to_vmem [thread:$0]  %s247, 128, %s250, %s239
        $region36: #{tpu_custom_call.1} parent=31 // pred_fallthru
          _
        // Predicated region
        $region37: #{tpu_custom_call.1} parent=31 // pred_check
          %p253 = pneg %p68
        $region38: #{tpu_custom_call.1} parent=31 // pred_check_branch
          %255 = sbr.rel (%p253) target = $region40
        $region39: #{tpu_custom_call.1} parent=31 // pred_region
          %s256 = sand.u32 %s22, 1
          %s257 = scalar_lea.sflag [#allocation6], %s256
          %s258 = sand.u32 %s58, 1
          %s259 = smul.addr %s258, 1024
          %s260 = scalar_lea.vmem [#allocation5], %s259
          %s262 = ssub.s32 16384, 16384
          %263 = vsyncadd %s257, %s262
          %s264 = smul.addr %s22, 128
          %s265 = scalar_lea.hbm %s1, %s264
          %s266 = sshll.u32 %s260, 4
          %s267 = int_to_ptr.vmem [resolvable:$true] %s266
          %272 = dma.hbm_to_vmem [thread:$0]  %s265, 16384, %s267, %s257, 256, 128, 8
        $region40: #{tpu_custom_call.1} parent=31 // pred_fallthru
          _
      $region32: #{tpu_custom_call.1} parent=5 // pred_fallthru
        _
      %p273 = scmp.le.s32.totalorder 1, %s22
      %p274 = scmp.lt.s32.totalorder %s22, 3
      %p275 = pnand %p273, %p274
      %p276 = pneg %p275
      // Predicated region
      $region41: #{tpu_custom_call.1} parent=5 // pred_check
        _
      $region42: #{tpu_custom_call.1} parent=5 // pred_check_branch
        %278 = sbr.rel (%p275) target = $region44
      $region43: #{tpu_custom_call.1} parent=5 // pred_region
        %s279 = ssub.s32 %s22, 1
        %s280 = sand.u32 %s35, 1
        %s281 = scalar_lea.sflag [#allocation3], %s280
        %s282 = sand.u32 %s35, 1
        %s283 = smul.addr %s282, 8
        %s284 = scalar_lea.vmem [#allocation2], %s283
        // Predicated region
        $region45: #{tpu_custom_call.1} parent=43 // pred_check
          %p285 = pneg %p48
        $region46: #{tpu_custom_call.1} parent=43 // pred_check_branch
          %287 = sbr.rel (%p285) target = $region48
        $region47: #{tpu_custom_call.1} parent=43 // pred_region
          %288 = dma.done %s281, 128
        $region48: #{tpu_custom_call.1} parent=43 // pred_fallthru
          _
        %s289 = sand.u32 %s27, 1
        %s290 = scalar_lea.sflag [#allocation6], %s289
        %s291 = sand.u32 %s61, 1
        %s292 = smul.addr %s291, 1024
        %s293 = scalar_lea.vmem [#allocation5], %s292
        // Predicated region
        $region49: #{tpu_custom_call.1} parent=43 // pred_check
          %p294 = pneg %p74
        $region50: #{tpu_custom_call.1} parent=43 // pred_check_branch
          %296 = sbr.rel (%p294) target = $region52
        $region51: #{tpu_custom_call.1} parent=43 // pred_region
          %297 = dma.done %s290, 16384
        $region52: #{tpu_custom_call.1} parent=43 // pred_fallthru
          _
        // Predicated region
        $region53: #{tpu_custom_call.1} parent=43 // pred_check
          %p298 = pneg %p95
        $region54: #{tpu_custom_call.1} parent=43 // pred_check_branch
          %300 = sbr.rel (%p298) target = $region56
        $region55: #{tpu_custom_call.1} parent=43 // pred_region
          %301 = dma.done [#allocation6], 2048
        $region56: #{tpu_custom_call.1} parent=43 // pred_fallthru
          _
        // Predicated region
        $region57: #{tpu_custom_call.1} parent=43 // pred_check
          %p302 = pneg %p116
        $region58: #{tpu_custom_call.1} parent=43 // pred_check_branch
          %304 = sbr.rel (%p302) target = $region60
        $region59: #{tpu_custom_call.1} parent=43 // pred_region
          %305 = dma.done [#allocation9], 2048
        $region60: #{tpu_custom_call.1} parent=43 // pred_fallthru
          _
        %s306 = sand.u32 %s35, 1
        %s307 = scalar_lea.sflag [#allocation3], %s306
        %s308 = sand.u32 %s35, 1
        %s309 = smul.addr %s308, 8
        %s310 = scalar_lea.vmem [#allocation2], %s309
        %p311 = pneg %p48
        %p312 = pneg %p45
        %s313 = sand.u32 %s27, 1
        %s314 = scalar_lea.sflag [#allocation6], %s313
        %s315 = sand.u32 %s61, 1
        %s316 = smul.addr %s315, 1024
        %s317 = scalar_lea.vmem [#allocation5], %s316
        %p318 = pneg %p74
        %p319 = pneg %p71
        %p320 = pneg %p95
        %p321 = pneg %p92
        %p322 = pneg %p116
        %p323 = pneg %p113
        %p324 = pneg %p137
        %p325 = pneg %p134
        %p326 = pneg %p158
        %p327 = pneg %p155
        %p328 = pneg %p184
        %p329 = pneg %p181
        %s330 = sand.u32 %s171, 1
        %s331 = scalar_lea.sflag [#allocation4], %s330
        %s332 = sand.u32 %s171, 1
        %s333 = smul.addr %s332, 8
        %s334 = scalar_lea.vmem [#allocation10], %s333
        %v335 = vld [vmem:[%s284] sm:$0xff]
        %v336 = vld [vmem:[#allocation7] sm:$0xff]
        %v337 = vld [vmem:[#allocation7 + $0x8] sm:$0xff]
        %v338 = vld [vmem:[#allocation7 + $0x10] sm:$0xff]
        %v339 = vld [vmem:[#allocation7 + $0x18] sm:$0xff]
        %v340 = vld [vmem:[#allocation7 + $0x20] sm:$0xff]
        %v341 = vld [vmem:[#allocation7 + $0x28] sm:$0xff]
        %v342 = vld [vmem:[#allocation7 + $0x30] sm:$0xff]
        %v343 = vld [vmem:[#allocation7 + $0x38] sm:$0xff]
        %v344 = vld [vmem:[#allocation7 + $0x40] sm:$0xff]
        %v345 = vld [vmem:[#allocation7 + $0x48] sm:$0xff]
        %v346 = vld [vmem:[#allocation7 + $0x50] sm:$0xff]
        %v347 = vld [vmem:[#allocation7 + $0x58] sm:$0xff]
        %v348 = vld [vmem:[#allocation7 + $0x60] sm:$0xff]
        %v349 = vld [vmem:[#allocation7 + $0x68] sm:$0xff]
        %v350 = vld [vmem:[#allocation7 + $0x70] sm:$0xff]
        %v351 = vld [vmem:[#allocation7 + $0x78] sm:$0xff]
        %v352 = vld [vmem:[%s4] sm:$0x1]
        %v354 = vlaneseq
        %v355 = vshrl.u32 %v354, 7
        %v356 = vsub.s32 0, %v355
        %v357 = vrot.slane %v352, %v356
        %359 = vmatprep.subr.mxu0 0.0
        %360 = vmatpush1.msra.mxu0 %v336
        %361 = vmatprep.subr.mxu0 0.0
        %362 = vmatpush1.msra.mxu0 %v337
        %363 = vmatprep.subr.mxu0 0.0
        %364 = vmatpush1.msra.mxu0 %v338
        %365 = vmatprep.subr.mxu0 0.0
        %366 = vmatpush1.msra.mxu0 %v339
        %367 = vmatprep.subr.mxu0 0.0
        %368 = vmatpush1.msra.mxu0 %v340
        %369 = vmatprep.subr.mxu0 0.0
        %370 = vmatpush1.msra.mxu0 %v341
        %371 = vmatprep.subr.mxu0 0.0
        %372 = vmatpush1.msra.mxu0 %v342
        %373 = vmatprep.subr.mxu0 0.0
        %374 = vmatpush1.msra.mxu0 %v343
        %375 = vmatprep.subr.mxu0 0.0
        %376 = vmatpush1.msra.mxu0 %v344
        %377 = vmatprep.subr.mxu0 0.0
        %378 = vmatpush1.msra.mxu0 %v345
        %379 = vmatprep.subr.mxu0 0.0
        %380 = vmatpush1.msra.mxu0 %v346
        %381 = vmatprep.subr.mxu0 0.0
        %382 = vmatpush1.msra.mxu0 %v347
        %383 = vmatprep.subr.mxu0 0.0
        %384 = vmatpush1.msra.mxu0 %v348
        %385 = vmatprep.subr.mxu0 0.0
        %386 = vmatpush1.msra.mxu0 %v349
        %387 = vmatprep.subr.mxu0 0.0
        %388 = vmatpush1.msra.mxu0 %v350
        %389 = vmatprep.subr.mxu0 0.0
        %390 = vmatpush1.msra.mxu0 %v351
        %391 = vmatprep.subr.mxu0 0.0
        %392 = vmatpush1.msra.mxu0 0.0
        %393 = vmatprep.subr.mxu0 0.0
        %394 = vmatpush1.msra.mxu0 0.0
        %395 = vmatprep.subr.mxu0 0.0
        %396 = vmatpush1.msra.mxu0 0.0
        %397 = vmatprep.subr.mxu0 0.0
        %398 = vmatpush1.msra.mxu0 0.0
        %399 = vmatprep.subr.mxu0 0.0
        %400 = vmatpush1.msra.mxu0 0.0
        %401 = vmatprep.subr.mxu0 0.0
        %402 = vmatpush1.msra.mxu0 0.0
        %403 = vmatprep.subr.mxu0 0.0
        %404 = vmatpush1.msra.mxu0 0.0
        %405 = vmatprep.subr.mxu0 0.0
        %406 = vmatpush1.msra.mxu0 0.0
        %407 = vmatprep.subr.mxu0 0.0
        %408 = vmatpush1.msra.mxu0 0.0
        %409 = vmatprep.subr.mxu0 0.0
        %410 = vmatpush1.msra.mxu0 0.0
        %411 = vmatprep.subr.mxu0 0.0
        %412 = vmatpush1.msra.mxu0 0.0
        %413 = vmatprep.subr.mxu0 0.0
        %414 = vmatpush1.msra.mxu0 0.0
        %415 = vmatprep.subr.mxu0 0.0
        %416 = vmatpush1.msra.mxu0 0.0
        %417 = vmatprep.subr.mxu0 0.0
        %418 = vmatpush1.msra.mxu0 0.0
        %419 = vmatprep.subr.mxu0 0.0
        %420 = vmatpush1.msra.mxu0 0.0
        %421 = vmatprep.subr.mxu0 0.0
        %422 = vmatpush1.msra.mxu0 0.0
        %423 = vmatprep.mubr.f32.mxu0 0.0
        %424 = vmatmul.mubr.f32.gmra.mrb[0].mxu0 %v335
        %v425 = vpop.f32.mrb[0].mxu0
        %v426 = vadd.f32 %v357, %v425
        %v427 = vpop.f32.mrb[0].mxu0
        %428 = vdwg.mxu0
        %v429 = vld [vmem:[%s293] sm:$0xff]
        %v430 = vld [vmem:[%s293 + $0x8] sm:$0xff]
        %v431 = vld [vmem:[%s293 + $0x10] sm:$0xff]
        %v432 = vld [vmem:[%s293 + $0x18] sm:$0xff]
        %v433 = vld [vmem:[%s293 + $0x20] sm:$0xff]
        %v434 = vld [vmem:[%s293 + $0x28] sm:$0xff]
        %v435 = vld [vmem:[%s293 + $0x30] sm:$0xff]
        %v436 = vld [vmem:[%s293 + $0x38] sm:$0xff]
        %v437 = vld [vmem:[%s293 + $0x40] sm:$0xff]
        %v438 = vld [vmem:[%s293 + $0x48] sm:$0xff]
        %v439 = vld [vmem:[%s293 + $0x50] sm:$0xff]
        %v440 = vld [vmem:[%s293 + $0x58] sm:$0xff]
        %v441 = vld [vmem:[%s293 + $0x60] sm:$0xff]
        %v442 = vld [vmem:[%s293 + $0x68] sm:$0xff]
        %v443 = vld [vmem:[%s293 + $0x70] sm:$0xff]
        %v444 = vld [vmem:[%s293 + $0x78] sm:$0xff]
        %v445 = vld [vmem:[%s293 + $0x80] sm:$0xff]
        %v446 = vld [vmem:[%s293 + $0x88] sm:$0xff]
        %v447 = vld [vmem:[%s293 + $0x90] sm:$0xff]
        %v448 = vld [vmem:[%s293 + $0x98] sm:$0xff]
        %v449 = vld [vmem:[%s293 + $0xa0] sm:$0xff]
        %v450 = vld [vmem:[%s293 + $0xa8] sm:$0xff]
        %v451 = vld [vmem:[%s293 + $0xb0] sm:$0xff]
        %v452 = vld [vmem:[%s293 + $0xb8] sm:$0xff]
        %v453 = vld [vmem:[%s293 + $0xc0] sm:$0xff]
        %v454 = vld [vmem:[%s293 + $0xc8] sm:$0xff]
        %v455 = vld [vmem:[%s293 + $0xd0] sm:$0xff]
        %v456 = vld [vmem:[%s293 + $0xd8] sm:$0xff]
        %v457 = vld [vmem:[%s293 + $0xe0] sm:$0xff]
        %v458 = vld [vmem:[%s293 + $0xe8] sm:$0xff]
        %v459 = vld [vmem:[%s293 + $0xf0] sm:$0xff]
        %v460 = vld [vmem:[%s293 + $0xf8] sm:$0xff]
        %v461 = vld [vmem:[%s293 + $0x100] sm:$0xff]
        %v462 = vld [vmem:[%s293 + $0x108] sm:$0xff]
        %v463 = vld [vmem:[%s293 + $0x110] sm:$0xff]
        %v464 = vld [vmem:[%s293 + $0x118] sm:$0xff]
        %v465 = vld [vmem:[%s293 + $0x120] sm:$0xff]
        %v466 = vld [vmem:[%s293 + $0x128] sm:$0xff]
        %v467 = vld [vmem:[%s293 + $0x130] sm:$0xff]
        %v468 = vld [vmem:[%s293 + $0x138] sm:$0xff]
        %v469 = vld [vmem:[%s293 + $0x140] sm:$0xff]
        %v470 = vld [vmem:[%s293 + $0x148] sm:$0xff]
        %v471 = vld [vmem:[%s293 + $0x150] sm:$0xff]
        %v472 = vld [vmem:[%s293 + $0x158] sm:$0xff]
        %v473 = vld [vmem:[%s293 + $0x160] sm:$0xff]
        %v474 = vld [vmem:[%s293 + $0x168] sm:$0xff]
        %v475 = vld [vmem:[%s293 + $0x170] sm:$0xff]
        %v476 = vld [vmem:[%s293 + $0x178] sm:$0xff]
        %v477 = vld [vmem:[%s293 + $0x180] sm:$0xff]
        %v478 = vld [vmem:[%s293 + $0x188] sm:$0xff]
        %v479 = vld [vmem:[%s293 + $0x190] sm:$0xff]
        %v480 = vld [vmem:[%s293 + $0x198] sm:$0xff]
        %v481 = vld [vmem:[%s293 + $0x1a0] sm:$0xff]
        %v482 = vld [vmem:[%s293 + $0x1a8] sm:$0xff]
        %v483 = vld [vmem:[%s293 + $0x1b0] sm:$0xff]
        %v484 = vld [vmem:[%s293 + $0x1b8] sm:$0xff]
        %v485 = vld [vmem:[%s293 + $0x1c0] sm:$0xff]
        %v486 = vld [vmem:[%s293 + $0x1c8] sm:$0xff]
        %v487 = vld [vmem:[%s293 + $0x1d0] sm:$0xff]
        %v488 = vld [vmem:[%s293 + $0x1d8] sm:$0xff]
        %v489 = vld [vmem:[%s293 + $0x1e0] sm:$0xff]
        %v490 = vld [vmem:[%s293 + $0x1e8] sm:$0xff]
        %v491 = vld [vmem:[%s293 + $0x1f0] sm:$0xff]
        %v492 = vld [vmem:[%s293 + $0x1f8] sm:$0xff]
        %v493 = vld [vmem:[%s293 + $0x200] sm:$0xff]
        %v494 = vld [vmem:[%s293 + $0x208] sm:$0xff]
        %v495 = vld [vmem:[%s293 + $0x210] sm:$0xff]
        %v496 = vld [vmem:[%s293 + $0x218] sm:$0xff]
        %v497 = vld [vmem:[%s293 + $0x220] sm:$0xff]
        %v498 = vld [vmem:[%s293 + $0x228] sm:$0xff]
        %v499 = vld [vmem:[%s293 + $0x230] sm:$0xff]
        %v500 = vld [vmem:[%s293 + $0x238] sm:$0xff]
        %v501 = vld [vmem:[%s293 + $0x240] sm:$0xff]
        %v502 = vld [vmem:[%s293 + $0x248] sm:$0xff]
        %v503 = vld [vmem:[%s293 + $0x250] sm:$0xff]
        %v504 = vld [vmem:[%s293 + $0x258] sm:$0xff]
        %v505 = vld [vmem:[%s293 + $0x260] sm:$0xff]
        %v506 = vld [vmem:[%s293 + $0x268] sm:$0xff]
        %v507 = vld [vmem:[%s293 + $0x270] sm:$0xff]
        %v508 = vld [vmem:[%s293 + $0x278] sm:$0xff]
        %v509 = vld [vmem:[%s293 + $0x280] sm:$0xff]
        %v510 = vld [vmem:[%s293 + $0x288] sm:$0xff]
        %v511 = vld [vmem:[%s293 + $0x290] sm:$0xff]
        %v512 = vld [vmem:[%s293 + $0x298] sm:$0xff]
        %v513 = vld [vmem:[%s293 + $0x2a0] sm:$0xff]
        %v514 = vld [vmem:[%s293 + $0x2a8] sm:$0xff]
        %v515 = vld [vmem:[%s293 + $0x2b0] sm:$0xff]
        %v516 = vld [vmem:[%s293 + $0x2b8] sm:$0xff]
        %v517 = vld [vmem:[%s293 + $0x2c0] sm:$0xff]
        %v518 = vld [vmem:[%s293 + $0x2c8] sm:$0xff]
        %v519 = vld [vmem:[%s293 + $0x2d0] sm:$0xff]
        %v520 = vld [vmem:[%s293 + $0x2d8] sm:$0xff]
        %v521 = vld [vmem:[%s293 + $0x2e0] sm:$0xff]
        %v522 = vld [vmem:[%s293 + $0x2e8] sm:$0xff]
        %v523 = vld [vmem:[%s293 + $0x2f0] sm:$0xff]
        %v524 = vld [vmem:[%s293 + $0x2f8] sm:$0xff]
        %v525 = vld [vmem:[%s293 + $0x300] sm:$0xff]
        %v526 = vld [vmem:[%s293 + $0x308] sm:$0xff]
        %v527 = vld [vmem:[%s293 + $0x310] sm:$0xff]
        %v528 = vld [vmem:[%s293 + $0x318] sm:$0xff]
        %v529 = vld [vmem:[%s293 + $0x320] sm:$0xff]
        %v530 = vld [vmem:[%s293 + $0x328] sm:$0xff]
        %v531 = vld [vmem:[%s293 + $0x330] sm:$0xff]
        %v532 = vld [vmem:[%s293 + $0x338] sm:$0xff]
        %v533 = vld [vmem:[%s293 + $0x340] sm:$0xff]
        %v534 = vld [vmem:[%s293 + $0x348] sm:$0xff]
        %v535 = vld [vmem:[%s293 + $0x350] sm:$0xff]
        %v536 = vld [vmem:[%s293 + $0x358] sm:$0xff]
        %v537 = vld [vmem:[%s293 + $0x360] sm:$0xff]
        %v538 = vld [vmem:[%s293 + $0x368] sm:$0xff]
        %v539 = vld [vmem:[%s293 + $0x370] sm:$0xff]
        %v540 = vld [vmem:[%s293 + $0x378] sm:$0xff]
        %v541 = vld [vmem:[%s293 + $0x380] sm:$0xff]
        %v542 = vld [vmem:[%s293 + $0x388] sm:$0xff]
        %v543 = vld [vmem:[%s293 + $0x390] sm:$0xff]
        %v544 = vld [vmem:[%s293 + $0x398] sm:$0xff]
        %v545 = vld [vmem:[%s293 + $0x3a0] sm:$0xff]
        %v546 = vld [vmem:[%s293 + $0x3a8] sm:$0xff]
        %v547 = vld [vmem:[%s293 + $0x3b0] sm:$0xff]
        %v548 = vld [vmem:[%s293 + $0x3b8] sm:$0xff]
        %v549 = vld [vmem:[%s293 + $0x3c0] sm:$0xff]
        %v550 = vld [vmem:[%s293 + $0x3c8] sm:$0xff]
        %v551 = vld [vmem:[%s293 + $0x3d0] sm:$0xff]
        %v552 = vld [vmem:[%s293 + $0x3d8] sm:$0xff]
        %v553 = vld [vmem:[%s293 + $0x3e0] sm:$0xff]
        %v554 = vld [vmem:[%s293 + $0x3e8] sm:$0xff]
        %v555 = vld [vmem:[%s293 + $0x3f0] sm:$0xff]
        %v556 = vld [vmem:[%s293 + $0x3f8] sm:$0xff]
        %v557 = vld [vmem:[#allocation8] sm:$0xff]
        %v558 = vld [vmem:[#allocation8 + $0x8] sm:$0xff]
        %v559 = vld [vmem:[#allocation8 + $0x10] sm:$0xff]
        %v560 = vld [vmem:[#allocation8 + $0x18] sm:$0xff]
        %v561 = vld [vmem:[#allocation8 + $0x20] sm:$0xff]
        %v562 = vld [vmem:[#allocation8 + $0x28] sm:$0xff]
        %v563 = vld [vmem:[#allocation8 + $0x30] sm:$0xff]
        %v564 = vld [vmem:[#allocation8 + $0x38] sm:$0xff]
        %v565 = vld [vmem:[#allocation8 + $0x40] sm:$0xff]
        %v566 = vld [vmem:[#allocation8 + $0x48] sm:$0xff]
        %v567 = vld [vmem:[#allocation8 + $0x50] sm:$0xff]
        %v568 = vld [vmem:[#allocation8 + $0x58] sm:$0xff]
        %v569 = vld [vmem:[#allocation8 + $0x60] sm:$0xff]
        %v570 = vld [vmem:[#allocation8 + $0x68] sm:$0xff]
        %v571 = vld [vmem:[#allocation8 + $0x70] sm:$0xff]
        %v572 = vld [vmem:[#allocation8 + $0x78] sm:$0xff]
        %573 = vmatprep.subr.mxu0 0.0
        %574 = vmatpush1.msra.mxu0 %v557
        %575 = vmatprep.subr.mxu0 0.0
        %576 = vmatpush1.msra.mxu0 %v558
        %577 = vmatprep.subr.mxu0 0.0
        %578 = vmatpush1.msra.mxu0 %v559
        %579 = vmatprep.subr.mxu0 0.0
        %580 = vmatpush1.msra.mxu0 %v560
        %581 = vmatprep.subr.mxu0 0.0
        %582 = vmatpush1.msra.mxu0 %v561
        %583 = vmatprep.subr.mxu0 0.0
        %584 = vmatpush1.msra.mxu0 %v562
        %585 = vmatprep.subr.mxu0 0.0
        %586 = vmatpush1.msra.mxu0 %v563
        %587 = vmatprep.subr.mxu0 0.0
        %588 = vmatpush1.msra.mxu0 %v564
        %589 = vmatprep.subr.mxu0 0.0
        %590 = vmatpush1.msra.mxu0 %v565
        %591 = vmatprep.subr.mxu0 0.0
        %592 = vmatpush1.msra.mxu0 %v566
        %593 = vmatprep.subr.mxu0 0.0
        %594 = vmatpush1.msra.mxu0 %v567
        %595 = vmatprep.subr.mxu0 0.0
        %596 = vmatpush1.msra.mxu0 %v568
        %597 = vmatprep.subr.mxu0 0.0
        %598 = vmatpush1.msra.mxu0 %v569
        %599 = vmatprep.subr.mxu0 0.0
        %600 = vmatpush1.msra.mxu0 %v570
        %601 = vmatprep.subr.mxu0 0.0
        %602 = vmatpush1.msra.mxu0 %v571
        %603 = vmatprep.subr.mxu0 0.0
        %604 = vmatpush1.msra.mxu0 %v572
        %605 = vmatprep.subr.mxu0 0.0
        %606 = vmatpush1.msra.mxu0 0.0
        %607 = vmatprep.subr.mxu0 0.0
        %608 = vmatpush1.msra.mxu0 0.0
        %609 = vmatprep.subr.mxu0 0.0
        %610 = vmatpush1.msra.mxu0 0.0
        %611 = vmatprep.subr.mxu0 0.0
        %612 = vmatpush1.msra.mxu0 0.0
        %613 = vmatprep.subr.mxu0 0.0
        %614 = vmatpush1.msra.mxu0 0.0
        %615 = vmatprep.subr.mxu0 0.0
        %616 = vmatpush1.msra.mxu0 0.0
        %617 = vmatprep.subr.mxu0 0.0
        %618 = vmatpush1.msra.mxu0 0.0
        %619 = vmatprep.subr.mxu0 0.0
        %620 = vmatpush1.msra.mxu0 0.0
        %621 = vmatprep.subr.mxu0 0.0
        %622 = vmatpush1.msra.mxu0 0.0
        %623 = vmatprep.subr.mxu0 0.0
        %624 = vmatpush1.msra.mxu0 0.0
        %625 = vmatprep.subr.mxu0 0.0
        %626 = vmatpush1.msra.mxu0 0.0
        %627 = vmatprep.subr.mxu0 0.0
        %628 = vmatpush1.msra.mxu0 0.0
        %629 = vmatprep.subr.mxu0 0.0
        %630 = vmatpush1.msra.mxu0 0.0
        %631 = vmatprep.subr.mxu0 0.0
        %632 = vmatpush1.msra.mxu0 0.0
        %633 = vmatprep.subr.mxu0 0.0
        %634 = vmatpush1.msra.mxu0 0.0
        %635 = vmatprep.subr.mxu0 0.0
        %636 = vmatpush1.msra.mxu0 0.0
        %637 = vmatprep.mubr.f32.mxu0 0.0
        %638 = vmatmul.mubr.f32.gmra.mrb[0].mxu0 %v429
        %v639 = vpop.f32.mrb[0].mxu0
        %v640 = vadd.f32 0.0, %v639
        %v641 = vpop.f32.mrb[0].mxu0
        %642 = vmatprep.mubr.f32.mxu0 0.0
        %643 = vmatmul.mubr.f32.gmra.mrb[0].mxu0 %v430
        %v644 = vpop.f32.mrb[0].mxu0
        %v645 = vadd.f32 0.0, %v644
        %v646 = vpop.f32.mrb[0].mxu0
        %647 = vmatprep.mubr.f32.mxu0 0.0
        %648 = vmatmul.mubr.f32.gmra.mrb[0].mxu0 %v431
        %v649 = vpop.f32.mrb[0].mxu0
        %v650 = vadd.f32 0.0, %v649
        %v651 = vpop.f32.mrb[0].mxu0
        %652 = vmatprep.mubr.f32.mxu0 0.0
        %653 = vmatmul.mubr.f32.gmra.mrb[0].mxu0 %v432
        %v654 = vpop.f32.mrb[0].mxu0
        %v655 = vadd.f32 0.0, %v654
        %v656 = vpop.f32.mrb[0].mxu0
        %657 = vmatprep.mubr.f32.mxu0 0.0
        %658 = vmatmul.mubr.f32.gmra.mrb[0].mxu0 %v433
        %v659 = vpop.f32.mrb[0].mxu0
        %v660 = vadd.f32 0.0, %v659
        %v661 = vpop.f32.mrb[0].mxu0
        %662 = vmatprep.mubr.f32.mxu0 0.0
        %663 = vmatmul.mubr.f32.gmra.mrb[0].mxu0 %v434
        %v664 = vpop.f32.mrb[0].mxu0
        %v665 = vadd.f32 0.0, %v664
        %v666 = vpop.f32.mrb[0].mxu0
        %667 = vmatprep.mubr.f32.mxu0 0.0
        %668 = vmatmul.mubr.f32.gmra.mrb[0].mxu0 %v435
        %v669 = vpop.f32.mrb[0].mxu0
        %v670 = vadd.f32 0.0, %v669
        %v671 = vpop.f32.mrb[0].mxu0
        %672 = vmatprep.mubr.f32.mxu0 0.0
        %673 = vmatmul.mubr.f32.gmra.mrb[0].mxu0 %v436
        %v674 = vpop.f32.mrb[0].mxu0
        %v675 = vadd.f32 0.0, %v674
        %v676 = vpop.f32.mrb[0].mxu0
        %677 = vmatprep.mubr.f32.mxu0 0.0
        %678 = vmatmul.mubr.f32.gmra.mrb[0].mxu0 %v437
        %v679 = vpop.f32.mrb[0].mxu0
        %v680 = vadd.f32 0.0, %v679
        %v681 = vpop.f32.mrb[0].mxu0
        %682 = vmatprep.mubr.f32.mxu0 0.0
        %683 = vmatmul.mubr.f32.gmra.mrb[0].mxu0 %v438
        %v684 = vpop.f32.mrb[0].mxu0
        %v685 = vadd.f32 0.0, %v684
        %v686 = vpop.f32.mrb[0].mxu0
        %687 = vmatprep.mubr.f32.mxu0 0.0
        %688 = vmatmul.mubr.f32.gmra.mrb[0].mxu0 %v439
        %v689 = vpop.f32.mrb[0].mxu0
        %v690 = vadd.f32 0.0, %v689
        %v691 = vpop.f32.mrb[0].mxu0
        %692 = vmatprep.mubr.f32.mxu0 0.0
        %693 = vmatmul.mubr.f32.gmra.mrb[0].mxu0 %v440
        %v694 = vpop.f32.mrb[0].mxu0
        %v695 = vadd.f32 0.0, %v694
        %v696 = vpop.f32.mrb[0].mxu0
        %697 = vmatprep.mubr.f32.mxu0 0.0
        %698 = vmatmul.mubr.f32.gmra.mrb[0].mxu0 %v441
        %v699 = vpop.f32.mrb[0].mxu0
        %v700 = vadd.f32 0.0, %v699
        %v701 = vpop.f32.mrb[0].mxu0
        %702 = vmatprep.mubr.f32.mxu0 0.0
        %703 = vmatmul.mubr.f32.gmra.mrb[0].mxu0 %v442
        %v704 = vpop.f32.mrb[0].mxu0
        %v705 = vadd.f32 0.0, %v704
        %v706 = vpop.f32.mrb[0].mxu0
        %707 = vmatprep.mubr.f32.mxu0 0.0
        %708 = vmatmul.mubr.f32.gmra.mrb[0].mxu0 %v443
        %v709 = vpop.f32.mrb[0].mxu0
        %v710 = vadd.f32 0.0, %v709
        %v711 = vpop.f32.mrb[0].mxu0
        %712 = vmatprep.mubr.f32.mxu0 0.0
        %713 = vmatmul.mubr.f32.gmra.mrb[0].mxu0 %v444
        %v714 = vpop.f32.mrb[0].mxu0
        %v715 = vadd.f32 0.0, %v714
        %v716 = vpop.f32.mrb[0].mxu0
        %717 = vmatprep.mubr.f32.mxu0 0.0
        %718 = vmatmul.mubr.f32.gmra.mrb[0].mxu0 %v445
        %v719 = vpop.f32.mrb[0].mxu0
        %v720 = vadd.f32 0.0, %v719
        %v721 = vpop.f32.mrb[0].mxu0
        %722 = vmatprep.mubr.f32.mxu0 0.0
        %723 = vmatmul.mubr.f32.gmra.mrb[0].mxu0 %v446
        %v724 = vpop.f32.mrb[0].mxu0
        %v725 = vadd.f32 0.0, %v724
        %v726 = vpop.f32.mrb[0].mxu0
        %727 = vmatprep.mubr.f32.mxu0 0.0
        %728 = vmatmul.mubr.f32.gmra.mrb[0].mxu0 %v447
        %v729 = vpop.f32.mrb[0].mxu0
        %v730 = vadd.f32 0.0, %v729
        %v731 = vpop.f32.mrb[0].mxu0
        %732 = vmatprep.mubr.f32.mxu0 0.0
        %733 = vmatmul.mubr.f32.gmra.mrb[0].mxu0 %v448
        %v734 = vpop.f32.mrb[0].mxu0
        %v735 = vadd.f32 0.0, %v734
        %v736 = vpop.f32.mrb[0].mxu0
        %737 = vmatprep.mubr.f32.mxu0 0.0
        %738 = vmatmul.mubr.f32.gmra.mrb[0].mxu0 %v449
        %v739 = vpop.f32.mrb[0].mxu0
        %v740 = vadd.f32 0.0, %v739
        %v741 = vpop.f32.mrb[0].mxu0
        %742 = vmatprep.mubr.f32.mxu0 0.0
        %743 = vmatmul.mubr.f32.gmra.mrb[0].mxu0 %v450
        %v744 = vpop.f32.mrb[0].mxu0
        %v745 = vadd.f32 0.0, %v744
        %v746 = vpop.f32.mrb[0].mxu0
        %747 = vmatprep.mubr.f32.mxu0 0.0
        %748 = vmatmul.mubr.f32.gmra.mrb[0].mxu0 %v451
        %v749 = vpop.f32.mrb[0].mxu0
        %v750 = vadd.f32 0.0, %v749
        %v751 = vpop.f32.mrb[0].mxu0
        %752 = vmatprep.mubr.f32.mxu0 0.0
        %753 = vmatmul.mubr.f32.gmra.mrb[0].mxu0 %v452
        %v754 = vpop.f32.mrb[0].mxu0
        %v755 = vadd.f32 0.0, %v754
        %v756 = vpop.f32.mrb[0].mxu0
        %757 = vmatprep.mubr.f32.mxu0 0.0
        %758 = vmatmul.mubr.f32.gmra.mrb[0].mxu0 %v453
        %v759 = vpop.f32.mrb[0].mxu0
        %v760 = vadd.f32 0.0, %v759
        %v761 = vpop.f32.mrb[0].mxu0
        %762 = vmatprep.mubr.f32.mxu0 0.0
        %763 = vmatmul.mubr.f32.gmra.mrb[0].mxu0 %v454
        %v764 = vpop.f32.mrb[0].mxu0
        %v765 = vadd.f32 0.0, %v764
        %v766 = vpop.f32.mrb[0].mxu0
        %767 = vmatprep.mubr.f32.mxu0 0.0
        %768 = vmatmul.mubr.f32.gmra.mrb[0].mxu0 %v455
        %v769 = vpop.f32.mrb[0].mxu0
        %v770 = vadd.f32 0.0, %v769
        %v771 = vpop.f32.mrb[0].mxu0
        %772 = vmatprep.mubr.f32.mxu0 0.0
        %773 = vmatmul.mubr.f32.gmra.mrb[0].mxu0 %v456
        %v774 = vpop.f32.mrb[0].mxu0
        %v775 = vadd.f32 0.0, %v774
        %v776 = vpop.f32.mrb[0].mxu0
        %777 = vmatprep.mubr.f32.mxu0 0.0
        %778 = vmatmul.mubr.f32.gmra.mrb[0].mxu0 %v457
        %v779 = vpop.f32.mrb[0].mxu0
        %v780 = vadd.f32 0.0, %v779
        %v781 = vpop.f32.mrb[0].mxu0
        %782 = vmatprep.mubr.f32.mxu0 0.0
        %783 = vmatmul.mubr.f32.gmra.mrb[0].mxu0 %v458
        %v784 = vpop.f32.mrb[0].mxu0
        %v785 = vadd.f32 0.0, %v784
        %v786 = vpop.f32.mrb[0].mxu0
        %787 = vmatprep.mubr.f32.mxu0 0.0
        %788 = vmatmul.mubr.f32.gmra.mrb[0].mxu0 %v459
        %v789 = vpop.f32.mrb[0].mxu0
        %v790 = vadd.f32 0.0, %v789
        %v791 = vpop.f32.mrb[0].mxu0
        %792 = vmatprep.mubr.f32.mxu0 0.0
        %793 = vmatmul.mubr.f32.gmra.mrb[0].mxu0 %v460
        %v794 = vpop.f32.mrb[0].mxu0
        %v795 = vadd.f32 0.0, %v794
        %v796 = vpop.f32.mrb[0].mxu0
        %797 = vmatprep.mubr.f32.mxu0 0.0
        %798 = vmatmul.mubr.f32.gmra.mrb[0].mxu0 %v461
        %v799 = vpop.f32.mrb[0].mxu0
        %v800 = vadd.f32 0.0, %v799
        %v801 = vpop.f32.mrb[0].mxu0
        %802 = vmatprep.mubr.f32.mxu0 0.0
        %803 = vmatmul.mubr.f32.gmra.mrb[0].mxu0 %v462
        %v804 = vpop.f32.mrb[0].mxu0
        %v805 = vadd.f32 0.0, %v804
        %v806 = vpop.f32.mrb[0].mxu0
        %807 = vmatprep.mubr.f32.mxu0 0.0
        %808 = vmatmul.mubr.f32.gmra.mrb[0].mxu0 %v463
        %v809 = vpop.f32.mrb[0].mxu0
        %v810 = vadd.f32 0.0, %v809
        %v811 = vpop.f32.mrb[0].mxu0
        %812 = vmatprep.mubr.f32.mxu0 0.0
        %813 = vmatmul.mubr.f32.gmra.mrb[0].mxu0 %v464
        %v814 = vpop.f32.mrb[0].mxu0
        %v815 = vadd.f32 0.0, %v814
        %v816 = vpop.f32.mrb[0].mxu0
        %817 = vmatprep.mubr.f32.mxu0 0.0
        %818 = vmatmul.mubr.f32.gmra.mrb[0].mxu0 %v465
        %v819 = vpop.f32.mrb[0].mxu0
        %v820 = vadd.f32 0.0, %v819
        %v821 = vpop.f32.mrb[0].mxu0
        %822 = vmatprep.mubr.f32.mxu0 0.0
        %823 = vmatmul.mubr.f32.gmra.mrb[0].mxu0 %v466
        %v824 = vpop.f32.mrb[0].mxu0
        %v825 = vadd.f32 0.0, %v824
        %v826 = vpop.f32.mrb[0].mxu0
        %827 = vmatprep.mubr.f32.mxu0 0.0
        %828 = vmatmul.mubr.f32.gmra.mrb[0].mxu0 %v467
        %v829 = vpop.f32.mrb[0].mxu0
        %v830 = vadd.f32 0.0, %v829
        %v831 = vpop.f32.mrb[0].mxu0
        %832 = vmatprep.mubr.f32.mxu0 0.0
        %833 = vmatmul.mubr.f32.gmra.mrb[0].mxu0 %v468
        %v834 = vpop.f32.mrb[0].mxu0
        %v835 = vadd.f32 0.0, %v834
        %v836 = vpop.f32.mrb[0].mxu0
        %837 = vmatprep.mubr.f32.mxu0 0.0
        %838 = vmatmul.mubr.f32.gmra.mrb[0].mxu0 %v469
        %v839 = vpop.f32.mrb[0].mxu0
        %v840 = vadd.f32 0.0, %v839
        %v841 = vpop.f32.mrb[0].mxu0
        %842 = vmatprep.mubr.f32.mxu0 0.0
        %843 = vmatmul.mubr.f32.gmra.mrb[0].mxu0 %v470
        %v844 = vpop.f32.mrb[0].mxu0
        %v845 = vadd.f32 0.0, %v844
        %v846 = vpop.f32.mrb[0].mxu0
        %847 = vmatprep.mubr.f32.mxu0 0.0
        %848 = vmatmul.mubr.f32.gmra.mrb[0].mxu0 %v471
        %v849 = vpop.f32.mrb[0].mxu0
        %v850 = vadd.f32 0.0, %v849
        %v851 = vpop.f32.mrb[0].mxu0
        %852 = vmatprep.mubr.f32.mxu0 0.0
        %853 = vmatmul.mubr.f32.gmra.mrb[0].mxu0 %v472
        %v854 = vpop.f32.mrb[0].mxu0
        %v855 = vadd.f32 0.0, %v854
        %v856 = vpop.f32.mrb[0].mxu0
        %857 = vmatprep.mubr.f32.mxu0 0.0
        %858 = vmatmul.mubr.f32.gmra.mrb[0].mxu0 %v473
        %v859 = vpop.f32.mrb[0].mxu0
        %v860 = vadd.f32 0.0, %v859
        %v861 = vpop.f32.mrb[0].mxu0
        %862 = vmatprep.mubr.f32.mxu0 0.0
        %863 = vmatmul.mubr.f32.gmra.mrb[0].mxu0 %v474
        %v864 = vpop.f32.mrb[0].mxu0
        %v865 = vadd.f32 0.0, %v864
        %v866 = vpop.f32.mrb[0].mxu0
        %867 = vmatprep.mubr.f32.mxu0 0.0
        %868 = vmatmul.mubr.f32.gmra.mrb[0].mxu0 %v475
        %v869 = vpop.f32.mrb[0].mxu0
        %v870 = vadd.f32 0.0, %v869
        %v871 = vpop.f32.mrb[0].mxu0
        %872 = vmatprep.mubr.f32.mxu0 0.0
        %873 = vmatmul.mubr.f32.gmra.mrb[0].mxu0 %v476
        %v874 = vpop.f32.mrb[0].mxu0
        %v875 = vadd.f32 0.0, %v874
        %v876 = vpop.f32.mrb[0].mxu0
        %877 = vmatprep.mubr.f32.mxu0 0.0
        %878 = vmatmul.mubr.f32.gmra.mrb[0].mxu0 %v477
        %v879 = vpop.f32.mrb[0].mxu0
        %v880 = vadd.f32 0.0, %v879
        %v881 = vpop.f32.mrb[0].mxu0
        %882 = vmatprep.mubr.f32.mxu0 0.0
        %883 = vmatmul.mubr.f32.gmra.mrb[0].mxu0 %v478
        %v884 = vpop.f32.mrb[0].mxu0
        %v885 = vadd.f32 0.0, %v884
        %v886 = vpop.f32.mrb[0].mxu0
        %887 = vmatprep.mubr.f32.mxu0 0.0
        %888 = vmatmul.mubr.f32.gmra.mrb[0].mxu0 %v479
        %v889 = vpop.f32.mrb[0].mxu0
        %v890 = vadd.f32 0.0, %v889
        %v891 = vpop.f32.mrb[0].mxu0
        %892 = vmatprep.mubr.f32.mxu0 0.0
        %893 = vmatmul.mubr.f32.gmra.mrb[0].mxu0 %v480
        %v894 = vpop.f32.mrb[0].mxu0
        %v895 = vadd.f32 0.0, %v894
        %v896 = vpop.f32.mrb[0].mxu0
        %897 = vmatprep.mubr.f32.mxu0 0.0
        %898 = vmatmul.mubr.f32.gmra.mrb[0].mxu0 %v481
        %v899 = vpop.f32.mrb[0].mxu0
        %v900 = vadd.f32 0.0, %v899
        %v901 = vpop.f32.mrb[0].mxu0
        %902 = vmatprep.mubr.f32.mxu0 0.0
        %903 = vmatmul.mubr.f32.gmra.mrb[0].mxu0 %v482
        %v904 = vpop.f32.mrb[0].mxu0
        %v905 = vadd.f32 0.0, %v904
        %v906 = vpop.f32.mrb[0].mxu0
        %907 = vmatprep.mubr.f32.mxu0 0.0
        %908 = vmatmul.mubr.f32.gmra.mrb[0].mxu0 %v483
        %v909 = vpop.f32.mrb[0].mxu0
        %v910 = vadd.f32 0.0, %v909
        %v911 = vpop.f32.mrb[0].mxu0
        %912 = vmatprep.mubr.f32.mxu0 0.0
        %913 = vmatmul.mubr.f32.gmra.mrb[0].mxu0 %v484
        %v914 = vpop.f32.mrb[0].mxu0
        %v915 = vadd.f32 0.0, %v914
        %v916 = vpop.f32.mrb[0].mxu0
        %917 = vmatprep.mubr.f32.mxu0 0.0
        %918 = vmatmul.mubr.f32.gmra.mrb[0].mxu0 %v485
        %v919 = vpop.f32.mrb[0].mxu0
        %v920 = vadd.f32 0.0, %v919
        %v921 = vpop.f32.mrb[0].mxu0
        %922 = vmatprep.mubr.f32.mxu0 0.0
        %923 = vmatmul.mubr.f32.gmra.mrb[0].mxu0 %v486
        %v924 = vpop.f32.mrb[0].mxu0
        %v925 = vadd.f32 0.0, %v924
        %v926 = vpop.f32.mrb[0].mxu0
        %927 = vmatprep.mubr.f32.mxu0 0.0
        %928 = vmatmul.mubr.f32.gmra.mrb[0].mxu0 %v487
        %v929 = vpop.f32.mrb[0].mxu0
        %v930 = vadd.f32 0.0, %v929
        %v931 = vpop.f32.mrb[0].mxu0
        %932 = vmatprep.mubr.f32.mxu0 0.0
        %933 = vmatmul.mubr.f32.gmra.mrb[0].mxu0 %v488
        %v934 = vpop.f32.mrb[0].mxu0
        %v935 = vadd.f32 0.0, %v934
        %v936 = vpop.f32.mrb[0].mxu0
        %937 = vmatprep.mubr.f32.mxu0 0.0
        %938 = vmatmul.mubr.f32.gmra.mrb[0].mxu0 %v489
        %v939 = vpop.f32.mrb[0].mxu0
        %v940 = vadd.f32 0.0, %v939
        %v941 = vpop.f32.mrb[0].mxu0
        %942 = vmatprep.mubr.f32.mxu0 0.0
        %943 = vmatmul.mubr.f32.gmra.mrb[0].mxu0 %v490
        %v944 = vpop.f32.mrb[0].mxu0
        %v945 = vadd.f32 0.0, %v944
        %v946 = vpop.f32.mrb[0].mxu0
        %947 = vmatprep.mubr.f32.mxu0 0.0
        %948 = vmatmul.mubr.f32.gmra.mrb[0].mxu0 %v491
        %v949 = vpop.f32.mrb[0].mxu0
        %v950 = vadd.f32 0.0, %v949
        %v951 = vpop.f32.mrb[0].mxu0
        %952 = vmatprep.mubr.f32.mxu0 0.0
        %953 = vmatmul.mubr.f32.gmra.mrb[0].mxu0 %v492
        %v954 = vpop.f32.mrb[0].mxu0
        %v955 = vadd.f32 0.0, %v954
        %v956 = vpop.f32.mrb[0].mxu0
        %957 = vmatprep.mubr.f32.mxu0 0.0
        %958 = vmatmul.mubr.f32.gmra.mrb[0].mxu0 %v493
        %v959 = vpop.f32.mrb[0].mxu0
        %v960 = vadd.f32 0.0, %v959
        %v961 = vpop.f32.mrb[0].mxu0
        %962 = vmatprep.mubr.f32.mxu0 0.0
        %963 = vmatmul.mubr.f32.gmra.mrb[0].mxu0 %v494
        %v964 = vpop.f32.mrb[0].mxu0
        %v965 = vadd.f32 0.0, %v964
        %v966 = vpop.f32.mrb[0].mxu0
        %967 = vmatprep.mubr.f32.mxu0 0.0
        %968 = vmatmul.mubr.f32.gmra.mrb[0].mxu0 %v495
        %v969 = vpop.f32.mrb[0].mxu0
        %v970 = vadd.f32 0.0, %v969
        %v971 = vpop.f32.mrb[0].mxu0
        %972 = vmatprep.mubr.f32.mxu0 0.0
        %973 = vmatmul.mubr.f32.gmra.mrb[0].mxu0 %v496
        %v974 = vpop.f32.mrb[0].mxu0
        %v975 = vadd.f32 0.0, %v974
        %v976 = vpop.f32.mrb[0].mxu0
        %977 = vmatprep.mubr.f32.mxu0 0.0
        %978 = vmatmul.mubr.f32.gmra.mrb[0].mxu0 %v497
        %v979 = vpop.f32.mrb[0].mxu0
        %v980 = vadd.f32 0.0, %v979
        %v981 = vpop.f32.mrb[0].mxu0
        %982 = vmatprep.mubr.f32.mxu0 0.0
        %983 = vmatmul.mubr.f32.gmra.mrb[0].mxu0 %v498
        %v984 = vpop.f32.mrb[0].mxu0
        %v985 = vadd.f32 0.0, %v984
        %v986 = vpop.f32.mrb[0].mxu0
        %987 = vmatprep.mubr.f32.mxu0 0.0
        %988 = vmatmul.mubr.f32.gmra.mrb[0].mxu0 %v499
        %v989 = vpop.f32.mrb[0].mxu0
        %v990 = vadd.f32 0.0, %v989
        %v991 = vpop.f32.mrb[0].mxu0
        %992 = vmatprep.mubr.f32.mxu0 0.0
        %993 = vmatmul.mubr.f32.gmra.mrb[0].mxu0 %v500
        %v994 = vpop.f32.mrb[0].mxu0
        %v995 = vadd.f32 0.0, %v994
        %v996 = vpop.f32.mrb[0].mxu0
        %997 = vmatprep.mubr.f32.mxu0 0.0
        %998 = vmatmul.mubr.f32.gmra.mrb[0].mxu0 %v501
        %v999 = vpop.f32.mrb[0].mxu0
        %v1000 = vadd.f32 0.0, %v999
        %v1001 = vpop.f32.mrb[0].mxu0
        %1002 = vmatprep.mubr.f32.mxu0 0.0
        %1003 = vmatmul.mubr.f32.gmra.mrb[0].mxu0 %v502
        %v1004 = vpop.f32.mrb[0].mxu0
        %v1005 = vadd.f32 0.0, %v1004
        %v1006 = vpop.f32.mrb[0].mxu0
        %1007 = vmatprep.mubr.f32.mxu0 0.0
        %1008 = vmatmul.mubr.f32.gmra.mrb[0].mxu0 %v503
        %v1009 = vpop.f32.mrb[0].mxu0
        %v1010 = vadd.f32 0.0, %v1009
        %v1011 = vpop.f32.mrb[0].mxu0
        %1012 = vmatprep.mubr.f32.mxu0 0.0
        %1013 = vmatmul.mubr.f32.gmra.mrb[0].mxu0 %v504
        %v1014 = vpop.f32.mrb[0].mxu0
        %v1015 = vadd.f32 0.0, %v1014
        %v1016 = vpop.f32.mrb[0].mxu0
        %1017 = vmatprep.mubr.f32.mxu0 0.0
        %1018 = vmatmul.mubr.f32.gmra.mrb[0].mxu0 %v505
        %v1019 = vpop.f32.mrb[0].mxu0
        %v1020 = vadd.f32 0.0, %v1019
        %v1021 = vpop.f32.mrb[0].mxu0
        %1022 = vmatprep.mubr.f32.mxu0 0.0
        %1023 = vmatmul.mubr.f32.gmra.mrb[0].mxu0 %v506
        %v1024 = vpop.f32.mrb[0].mxu0
        %v1025 = vadd.f32 0.0, %v1024
        %v1026 = vpop.f32.mrb[0].mxu0
        %1027 = vmatprep.mubr.f32.mxu0 0.0
        %1028 = vmatmul.mubr.f32.gmra.mrb[0].mxu0 %v507
        %v1029 = vpop.f32.mrb[0].mxu0
        %v1030 = vadd.f32 0.0, %v1029
        %v1031 = vpop.f32.mrb[0].mxu0
        %1032 = vmatprep.mubr.f32.mxu0 0.0
        %1033 = vmatmul.mubr.f32.gmra.mrb[0].mxu0 %v508
        %v1034 = vpop.f32.mrb[0].mxu0
        %v1035 = vadd.f32 0.0, %v1034
        %v1036 = vpop.f32.mrb[0].mxu0
        %1037 = vmatprep.mubr.f32.mxu0 0.0
        %1038 = vmatmul.mubr.f32.gmra.mrb[0].mxu0 %v509
        %v1039 = vpop.f32.mrb[0].mxu0
        %v1040 = vadd.f32 0.0, %v1039
        %v1041 = vpop.f32.mrb[0].mxu0
        %1042 = vmatprep.mubr.f32.mxu0 0.0
        %1043 = vmatmul.mubr.f32.gmra.mrb[0].mxu0 %v510
        %v1044 = vpop.f32.mrb[0].mxu0
        %v1045 = vadd.f32 0.0, %v1044
        %v1046 = vpop.f32.mrb[0].mxu0
        %1047 = vmatprep.mubr.f32.mxu0 0.0
        %1048 = vmatmul.mubr.f32.gmra.mrb[0].mxu0 %v511
        %v1049 = vpop.f32.mrb[0].mxu0
        %v1050 = vadd.f32 0.0, %v1049
        %v1051 = vpop.f32.mrb[0].mxu0
        %1052 = vmatprep.mubr.f32.mxu0 0.0
        %1053 = vmatmul.mubr.f32.gmra.mrb[0].mxu0 %v512
        %v1054 = vpop.f32.mrb[0].mxu0
        %v1055 = vadd.f32 0.0, %v1054
        %v1056 = vpop.f32.mrb[0].mxu0
        %1057 = vmatprep.mubr.f32.mxu0 0.0
        %1058 = vmatmul.mubr.f32.gmra.mrb[0].mxu0 %v513
        %v1059 = vpop.f32.mrb[0].mxu0
        %v1060 = vadd.f32 0.0, %v1059
        %v1061 = vpop.f32.mrb[0].mxu0
        %1062 = vmatprep.mubr.f32.mxu0 0.0
        %1063 = vmatmul.mubr.f32.gmra.mrb[0].mxu0 %v514
        %v1064 = vpop.f32.mrb[0].mxu0
        %v1065 = vadd.f32 0.0, %v1064
        %v1066 = vpop.f32.mrb[0].mxu0
        %1067 = vmatprep.mubr.f32.mxu0 0.0
        %1068 = vmatmul.mubr.f32.gmra.mrb[0].mxu0 %v515
        %v1069 = vpop.f32.mrb[0].mxu0
        %v1070 = vadd.f32 0.0, %v1069
        %v1071 = vpop.f32.mrb[0].mxu0
        %1072 = vmatprep.mubr.f32.mxu0 0.0
        %1073 = vmatmul.mubr.f32.gmra.mrb[0].mxu0 %v516
        %v1074 = vpop.f32.mrb[0].mxu0
        %v1075 = vadd.f32 0.0, %v1074
        %v1076 = vpop.f32.mrb[0].mxu0
        %1077 = vmatprep.mubr.f32.mxu0 0.0
        %1078 = vmatmul.mubr.f32.gmra.mrb[0].mxu0 %v517
        %v1079 = vpop.f32.mrb[0].mxu0
        %v1080 = vadd.f32 0.0, %v1079
        %v1081 = vpop.f32.mrb[0].mxu0
        %1082 = vmatprep.mubr.f32.mxu0 0.0
        %1083 = vmatmul.mubr.f32.gmra.mrb[0].mxu0 %v518
        %v1084 = vpop.f32.mrb[0].mxu0
        %v1085 = vadd.f32 0.0, %v1084
        %v1086 = vpop.f32.mrb[0].mxu0
        %1087 = vmatprep.mubr.f32.mxu0 0.0
        %1088 = vmatmul.mubr.f32.gmra.mrb[0].mxu0 %v519
        %v1089 = vpop.f32.mrb[0].mxu0
        %v1090 = vadd.f32 0.0, %v1089
        %v1091 = vpop.f32.mrb[0].mxu0
        %1092 = vmatprep.mubr.f32.mxu0 0.0
        %1093 = vmatmul.mubr.f32.gmra.mrb[0].mxu0 %v520
        %v1094 = vpop.f32.mrb[0].mxu0
        %v1095 = vadd.f32 0.0, %v1094
        %v1096 = vpop.f32.mrb[0].mxu0
        %1097 = vmatprep.mubr.f32.mxu0 0.0
        %1098 = vmatmul.mubr.f32.gmra.mrb[0].mxu0 %v521
        %v1099 = vpop.f32.mrb[0].mxu0
        %v1100 = vadd.f32 0.0, %v1099
        %v1101 = vpop.f32.mrb[0].mxu0
        %1102 = vmatprep.mubr.f32.mxu0 0.0
        %1103 = vmatmul.mubr.f32.gmra.mrb[0].mxu0 %v522
        %v1104 = vpop.f32.mrb[0].mxu0
        %v1105 = vadd.f32 0.0, %v1104
        %v1106 = vpop.f32.mrb[0].mxu0
        %1107 = vmatprep.mubr.f32.mxu0 0.0
        %1108 = vmatmul.mubr.f32.gmra.mrb[0].mxu0 %v523
        %v1109 = vpop.f32.mrb[0].mxu0
        %v1110 = vadd.f32 0.0, %v1109
        %v1111 = vpop.f32.mrb[0].mxu0
        %1112 = vmatprep.mubr.f32.mxu0 0.0
        %1113 = vmatmul.mubr.f32.gmra.mrb[0].mxu0 %v524
        %v1114 = vpop.f32.mrb[0].mxu0
        %v1115 = vadd.f32 0.0, %v1114
        %v1116 = vpop.f32.mrb[0].mxu0
        %1117 = vmatprep.mubr.f32.mxu0 0.0
        %1118 = vmatmul.mubr.f32.gmra.mrb[0].mxu0 %v525
        %v1119 = vpop.f32.mrb[0].mxu0
        %v1120 = vadd.f32 0.0, %v1119
        %v1121 = vpop.f32.mrb[0].mxu0
        %1122 = vmatprep.mubr.f32.mxu0 0.0
        %1123 = vmatmul.mubr.f32.gmra.mrb[0].mxu0 %v526
        %v1124 = vpop.f32.mrb[0].mxu0
        %v1125 = vadd.f32 0.0, %v1124
        %v1126 = vpop.f32.mrb[0].mxu0
        %1127 = vmatprep.mubr.f32.mxu0 0.0
        %1128 = vmatmul.mubr.f32.gmra.mrb[0].mxu0 %v527
        %v1129 = vpop.f32.mrb[0].mxu0
        %v1130 = vadd.f32 0.0, %v1129
        %v1131 = vpop.f32.mrb[0].mxu0
        %1132 = vmatprep.mubr.f32.mxu0 0.0
        %1133 = vmatmul.mubr.f32.gmra.mrb[0].mxu0 %v528
        %v1134 = vpop.f32.mrb[0].mxu0
        %v1135 = vadd.f32 0.0, %v1134
        %v1136 = vpop.f32.mrb[0].mxu0
        %1137 = vmatprep.mubr.f32.mxu0 0.0
        %1138 = vmatmul.mubr.f32.gmra.mrb[0].mxu0 %v529
        %v1139 = vpop.f32.mrb[0].mxu0
        %v1140 = vadd.f32 0.0, %v1139
        %v1141 = vpop.f32.mrb[0].mxu0
        %1142 = vmatprep.mubr.f32.mxu0 0.0
        %1143 = vmatmul.mubr.f32.gmra.mrb[0].mxu0 %v530
        %v1144 = vpop.f32.mrb[0].mxu0
        %v1145 = vadd.f32 0.0, %v1144
        %v1146 = vpop.f32.mrb[0].mxu0
        %1147 = vmatprep.mubr.f32.mxu0 0.0
        %1148 = vmatmul.mubr.f32.gmra.mrb[0].mxu0 %v531
        %v1149 = vpop.f32.mrb[0].mxu0
        %v1150 = vadd.f32 0.0, %v1149
        %v1151 = vpop.f32.mrb[0].mxu0
        %1152 = vmatprep.mubr.f32.mxu0 0.0
        %1153 = vmatmul.mubr.f32.gmra.mrb[0].mxu0 %v532
        %v1154 = vpop.f32.mrb[0].mxu0
        %v1155 = vadd.f32 0.0, %v1154
        %v1156 = vpop.f32.mrb[0].mxu0
        %1157 = vmatprep.mubr.f32.mxu0 0.0
        %1158 = vmatmul.mubr.f32.gmra.mrb[0].mxu0 %v533
        %v1159 = vpop.f32.mrb[0].mxu0
        %v1160 = vadd.f32 0.0, %v1159
        %v1161 = vpop.f32.mrb[0].mxu0
        %1162 = vmatprep.mubr.f32.mxu0 0.0
        %1163 = vmatmul.mubr.f32.gmra.mrb[0].mxu0 %v534
        %v1164 = vpop.f32.mrb[0].mxu0
        %v1165 = vadd.f32 0.0, %v1164
        %v1166 = vpop.f32.mrb[0].mxu0
        %1167 = vmatprep.mubr.f32.mxu0 0.0
        %1168 = vmatmul.mubr.f32.gmra.mrb[0].mxu0 %v535
        %v1169 = vpop.f32.mrb[0].mxu0
        %v1170 = vadd.f32 0.0, %v1169
        %v1171 = vpop.f32.mrb[0].mxu0
        %1172 = vmatprep.mubr.f32.mxu0 0.0
        %1173 = vmatmul.mubr.f32.gmra.mrb[0].mxu0 %v536
        %v1174 = vpop.f32.mrb[0].mxu0
        %v1175 = vadd.f32 0.0, %v1174
        %v1176 = vpop.f32.mrb[0].mxu0
        %1177 = vmatprep.mubr.f32.mxu0 0.0
        %1178 = vmatmul.mubr.f32.gmra.mrb[0].mxu0 %v537
        %v1179 = vpop.f32.mrb[0].mxu0
        %v1180 = vadd.f32 0.0, %v1179
        %v1181 = vpop.f32.mrb[0].mxu0
        %1182 = vmatprep.mubr.f32.mxu0 0.0
        %1183 = vmatmul.mubr.f32.gmra.mrb[0].mxu0 %v538
        %v1184 = vpop.f32.mrb[0].mxu0
        %v1185 = vadd.f32 0.0, %v1184
        %v1186 = vpop.f32.mrb[0].mxu0
        %1187 = vmatprep.mubr.f32.mxu0 0.0
        %1188 = vmatmul.mubr.f32.gmra.mrb[0].mxu0 %v539
        %v1189 = vpop.f32.mrb[0].mxu0
        %v1190 = vadd.f32 0.0, %v1189
        %v1191 = vpop.f32.mrb[0].mxu0
        %1192 = vmatprep.mubr.f32.mxu0 0.0
        %1193 = vmatmul.mubr.f32.gmra.mrb[0].mxu0 %v540
        %v1194 = vpop.f32.mrb[0].mxu0
        %v1195 = vadd.f32 0.0, %v1194
        %v1196 = vpop.f32.mrb[0].mxu0
        %1197 = vmatprep.mubr.f32.mxu0 0.0
        %1198 = vmatmul.mubr.f32.gmra.mrb[0].mxu0 %v541
        %v1199 = vpop.f32.mrb[0].mxu0
        %v1200 = vadd.f32 0.0, %v1199
        %v1201 = vpop.f32.mrb[0].mxu0
        %1202 = vmatprep.mubr.f32.mxu0 0.0
        %1203 = vmatmul.mubr.f32.gmra.mrb[0].mxu0 %v542
        %v1204 = vpop.f32.mrb[0].mxu0
        %v1205 = vadd.f32 0.0, %v1204
        %v1206 = vpop.f32.mrb[0].mxu0
        %1207 = vmatprep.mubr.f32.mxu0 0.0
        %1208 = vmatmul.mubr.f32.gmra.mrb[0].mxu0 %v543
        %v1209 = vpop.f32.mrb[0].mxu0
        %v1210 = vadd.f32 0.0, %v1209
        %v1211 = vpop.f32.mrb[0].mxu0
        %1212 = vmatprep.mubr.f32.mxu0 0.0
        %1213 = vmatmul.mubr.f32.gmra.mrb[0].mxu0 %v544
        %v1214 = vpop.f32.mrb[0].mxu0
        %v1215 = vadd.f32 0.0, %v1214
        %v1216 = vpop.f32.mrb[0].mxu0
        %1217 = vmatprep.mubr.f32.mxu0 0.0
        %1218 = vmatmul.mubr.f32.gmra.mrb[0].mxu0 %v545
        %v1219 = vpop.f32.mrb[0].mxu0
        %v1220 = vadd.f32 0.0, %v1219
        %v1221 = vpop.f32.mrb[0].mxu0
        %1222 = vmatprep.mubr.f32.mxu0 0.0
        %1223 = vmatmul.mubr.f32.gmra.mrb[0].mxu0 %v546
        %v1224 = vpop.f32.mrb[0].mxu0
        %v1225 = vadd.f32 0.0, %v1224
        %v1226 = vpop.f32.mrb[0].mxu0
        %1227 = vmatprep.mubr.f32.mxu0 0.0
        %1228 = vmatmul.mubr.f32.gmra.mrb[0].mxu0 %v547
        %v1229 = vpop.f32.mrb[0].mxu0
        %v1230 = vadd.f32 0.0, %v1229
        %v1231 = vpop.f32.mrb[0].mxu0
        %1232 = vmatprep.mubr.f32.mxu0 0.0
        %1233 = vmatmul.mubr.f32.gmra.mrb[0].mxu0 %v548
        %v1234 = vpop.f32.mrb[0].mxu0
        %v1235 = vadd.f32 0.0, %v1234
        %v1236 = vpop.f32.mrb[0].mxu0
        %1237 = vmatprep.mubr.f32.mxu0 0.0
        %1238 = vmatmul.mubr.f32.gmra.mrb[0].mxu0 %v549
        %v1239 = vpop.f32.mrb[0].mxu0
        %v1240 = vadd.f32 0.0, %v1239
        %v1241 = vpop.f32.mrb[0].mxu0
        %1242 = vmatprep.mubr.f32.mxu0 0.0
        %1243 = vmatmul.mubr.f32.gmra.mrb[0].mxu0 %v550
        %v1244 = vpop.f32.mrb[0].mxu0
        %v1245 = vadd.f32 0.0, %v1244
        %v1246 = vpop.f32.mrb[0].mxu0
        %1247 = vmatprep.mubr.f32.mxu0 0.0
        %1248 = vmatmul.mubr.f32.gmra.mrb[0].mxu0 %v551
        %v1249 = vpop.f32.mrb[0].mxu0
        %v1250 = vadd.f32 0.0, %v1249
        %v1251 = vpop.f32.mrb[0].mxu0
        %1252 = vmatprep.mubr.f32.mxu0 0.0
        %1253 = vmatmul.mubr.f32.gmra.mrb[0].mxu0 %v552
        %v1254 = vpop.f32.mrb[0].mxu0
        %v1255 = vadd.f32 0.0, %v1254
        %v1256 = vpop.f32.mrb[0].mxu0
        %1257 = vmatprep.mubr.f32.mxu0 0.0
        %1258 = vmatmul.mubr.f32.gmra.mrb[0].mxu0 %v553
        %v1259 = vpop.f32.mrb[0].mxu0
        %v1260 = vadd.f32 0.0, %v1259
        %v1261 = vpop.f32.mrb[0].mxu0
        %1262 = vmatprep.mubr.f32.mxu0 0.0
        %1263 = vmatmul.mubr.f32.gmra.mrb[0].mxu0 %v554
        %v1264 = vpop.f32.mrb[0].mxu0
        %v1265 = vadd.f32 0.0, %v1264
        %v1266 = vpop.f32.mrb[0].mxu0
        %1267 = vmatprep.mubr.f32.mxu0 0.0
        %1268 = vmatmul.mubr.f32.gmra.mrb[0].mxu0 %v555
        %v1269 = vpop.f32.mrb[0].mxu0
        %v1270 = vadd.f32 0.0, %v1269
        %v1271 = vpop.f32.mrb[0].mxu0
        %1272 = vmatprep.mubr.f32.mxu0 0.0
        %1273 = vmatmul.mubr.f32.gmra.mrb[0].mxu0 %v556
        %v1274 = vpop.f32.mrb[0].mxu0
        %v1275 = vadd.f32 0.0, %v1274
        %v1276 = vpop.f32.mrb[0].mxu0
        %1277 = vdwg.mxu0
        %v1278 = vadd.f32 %v640, %v426
        %v1279 = vadd.f32 %v645, %v426
        %v1280 = vadd.f32 %v650, %v426
        %v1281 = vadd.f32 %v655, %v426
        %v1282 = vadd.f32 %v660, %v426
        %v1283 = vadd.f32 %v665, %v426
        %v1284 = vadd.f32 %v670, %v426
        %v1285 = vadd.f32 %v675, %v426
        %v1286 = vadd.f32 %v680, %v426
        %v1287 = vadd.f32 %v685, %v426
        %v1288 = vadd.f32 %v690, %v426
        %v1289 = vadd.f32 %v695, %v426
        %v1290 = vadd.f32 %v700, %v426
        %v1291 = vadd.f32 %v705, %v426
        %v1292 = vadd.f32 %v710, %v426
        %v1293 = vadd.f32 %v715, %v426
        %v1294 = vadd.f32 %v720, %v426
        %v1295 = vadd.f32 %v725, %v426
        %v1296 = vadd.f32 %v730, %v426
        %v1297 = vadd.f32 %v735, %v426
        %v1298 = vadd.f32 %v740, %v426
        %v1299 = vadd.f32 %v745, %v426
        %v1300 = vadd.f32 %v750, %v426
        %v1301 = vadd.f32 %v755, %v426
        %v1302 = vadd.f32 %v760, %v426
        %v1303 = vadd.f32 %v765, %v426
        %v1304 = vadd.f32 %v770, %v426
        %v1305 = vadd.f32 %v775, %v426
        %v1306 = vadd.f32 %v780, %v426
        %v1307 = vadd.f32 %v785, %v426
        %v1308 = vadd.f32 %v790, %v426
        %v1309 = vadd.f32 %v795, %v426
        %v1310 = vadd.f32 %v800, %v426
        %v1311 = vadd.f32 %v805, %v426
        %v1312 = vadd.f32 %v810, %v426
        %v1313 = vadd.f32 %v815, %v426
        %v1314 = vadd.f32 %v820, %v426
        %v1315 = vadd.f32 %v825, %v426
        %v1316 = vadd.f32 %v830, %v426
        %v1317 = vadd.f32 %v835, %v426
        %v1318 = vadd.f32 %v840, %v426
        %v1319 = vadd.f32 %v845, %v426
        %v1320 = vadd.f32 %v850, %v426
        %v1321 = vadd.f32 %v855, %v426
        %v1322 = vadd.f32 %v860, %v426
        %v1323 = vadd.f32 %v865, %v426
        %v1324 = vadd.f32 %v870, %v426
        %v1325 = vadd.f32 %v875, %v426
        %v1326 = vadd.f32 %v880, %v426
        %v1327 = vadd.f32 %v885, %v426
        %v1328 = vadd.f32 %v890, %v426
        %v1329 = vadd.f32 %v895, %v426
        %v1330 = vadd.f32 %v900, %v426
        %v1331 = vadd.f32 %v905, %v426
        %v1332 = vadd.f32 %v910, %v426
        %v1333 = vadd.f32 %v915, %v426
        %v1334 = vadd.f32 %v920, %v426
        %v1335 = vadd.f32 %v925, %v426
        %v1336 = vadd.f32 %v930, %v426
        %v1337 = vadd.f32 %v935, %v426
        %v1338 = vadd.f32 %v940, %v426
        %v1339 = vadd.f32 %v945, %v426
        %v1340 = vadd.f32 %v950, %v426
        %v1341 = vadd.f32 %v955, %v426
        %v1342 = vadd.f32 %v960, %v426
        %v1343 = vadd.f32 %v965, %v426
        %v1344 = vadd.f32 %v970, %v426
        %v1345 = vadd.f32 %v975, %v426
        %v1346 = vadd.f32 %v980, %v426
        %v1347 = vadd.f32 %v985, %v426
        %v1348 = vadd.f32 %v990, %v426
        %v1349 = vadd.f32 %v995, %v426
        %v1350 = vadd.f32 %v1000, %v426
        %v1351 = vadd.f32 %v1005, %v426
        %v1352 = vadd.f32 %v1010, %v426
        %v1353 = vadd.f32 %v1015, %v426
        %v1354 = vadd.f32 %v1020, %v426
        %v1355 = vadd.f32 %v1025, %v426
        %v1356 = vadd.f32 %v1030, %v426
        %v1357 = vadd.f32 %v1035, %v426
        %v1358 = vadd.f32 %v1040, %v426
        %v1359 = vadd.f32 %v1045, %v426
        %v1360 = vadd.f32 %v1050, %v426
        %v1361 = vadd.f32 %v1055, %v426
        %v1362 = vadd.f32 %v1060, %v426
        %v1363 = vadd.f32 %v1065, %v426
        %v1364 = vadd.f32 %v1070, %v426
        %v1365 = vadd.f32 %v1075, %v426
        %v1366 = vadd.f32 %v1080, %v426
        %v1367 = vadd.f32 %v1085, %v426
        %v1368 = vadd.f32 %v1090, %v426
        %v1369 = vadd.f32 %v1095, %v426
        %v1370 = vadd.f32 %v1100, %v426
        %v1371 = vadd.f32 %v1105, %v426
        %v1372 = vadd.f32 %v1110, %v426
        %v1373 = vadd.f32 %v1115, %v426
        %v1374 = vadd.f32 %v1120, %v426
        %v1375 = vadd.f32 %v1125, %v426
        %v1376 = vadd.f32 %v1130, %v426
        %v1377 = vadd.f32 %v1135, %v426
        %v1378 = vadd.f32 %v1140, %v426
        %v1379 = vadd.f32 %v1145, %v426
        %v1380 = vadd.f32 %v1150, %v426
        %v1381 = vadd.f32 %v1155, %v426
        %v1382 = vadd.f32 %v1160, %v426
        %v1383 = vadd.f32 %v1165, %v426
        %v1384 = vadd.f32 %v1170, %v426
        %v1385 = vadd.f32 %v1175, %v426
        %v1386 = vadd.f32 %v1180, %v426
        %v1387 = vadd.f32 %v1185, %v426
        %v1388 = vadd.f32 %v1190, %v426
        %v1389 = vadd.f32 %v1195, %v426
        %v1390 = vadd.f32 %v1200, %v426
        %v1391 = vadd.f32 %v1205, %v426
        %v1392 = vadd.f32 %v1210, %v426
        %v1393 = vadd.f32 %v1215, %v426
        %v1394 = vadd.f32 %v1220, %v426
        %v1395 = vadd.f32 %v1225, %v426
        %v1396 = vadd.f32 %v1230, %v426
        %v1397 = vadd.f32 %v1235, %v426
        %v1398 = vadd.f32 %v1240, %v426
        %v1399 = vadd.f32 %v1245, %v426
        %v1400 = vadd.f32 %v1250, %v426
        %v1401 = vadd.f32 %v1255, %v426
        %v1402 = vadd.f32 %v1260, %v426
        %v1403 = vadd.f32 %v1265, %v426
        %v1404 = vadd.f32 %v1270, %v426
        %v1405 = vadd.f32 %v1275, %v426
        %v1406 = vtanh.pop %v1278
        %v1407 = vtanh.pop %v1279
        %v1408 = vtanh.pop %v1280
        %v1409 = vtanh.pop %v1281
        %v1410 = vtanh.pop %v1282
        %v1411 = vtanh.pop %v1283
        %v1412 = vtanh.pop %v1284
        %v1413 = vtanh.pop %v1285
        %v1414 = vtanh.pop %v1286
        %v1415 = vtanh.pop %v1287
        %v1416 = vtanh.pop %v1288
        %v1417 = vtanh.pop %v1289
        %v1418 = vtanh.pop %v1290
        %v1419 = vtanh.pop %v1291
        %v1420 = vtanh.pop %v1292
        %v1421 = vtanh.pop %v1293
        %v1422 = vtanh.pop %v1294
        %v1423 = vtanh.pop %v1295
        %v1424 = vtanh.pop %v1296
        %v1425 = vtanh.pop %v1297
        %v1426 = vtanh.pop %v1298
        %v1427 = vtanh.pop %v1299
        %v1428 = vtanh.pop %v1300
        %v1429 = vtanh.pop %v1301
        %v1430 = vtanh.pop %v1302
        %v1431 = vtanh.pop %v1303
        %v1432 = vtanh.pop %v1304
        %v1433 = vtanh.pop %v1305
        %v1434 = vtanh.pop %v1306
        %v1435 = vtanh.pop %v1307
        %v1436 = vtanh.pop %v1308
        %v1437 = vtanh.pop %v1309
        %v1438 = vtanh.pop %v1310
        %v1439 = vtanh.pop %v1311
        %v1440 = vtanh.pop %v1312
        %v1441 = vtanh.pop %v1313
        %v1442 = vtanh.pop %v1314
        %v1443 = vtanh.pop %v1315
        %v1444 = vtanh.pop %v1316
        %v1445 = vtanh.pop %v1317
        %v1446 = vtanh.pop %v1318
        %v1447 = vtanh.pop %v1319
        %v1448 = vtanh.pop %v1320
        %v1449 = vtanh.pop %v1321
        %v1450 = vtanh.pop %v1322
        %v1451 = vtanh.pop %v1323
        %v1452 = vtanh.pop %v1324
        %v1453 = vtanh.pop %v1325
        %v1454 = vtanh.pop %v1326
        %v1455 = vtanh.pop %v1327
        %v1456 = vtanh.pop %v1328
        %v1457 = vtanh.pop %v1329
        %v1458 = vtanh.pop %v1330
        %v1459 = vtanh.pop %v1331
        %v1460 = vtanh.pop %v1332
        %v1461 = vtanh.pop %v1333
        %v1462 = vtanh.pop %v1334
        %v1463 = vtanh.pop %v1335
        %v1464 = vtanh.pop %v1336
        %v1465 = vtanh.pop %v1337
        %v1466 = vtanh.pop %v1338
        %v1467 = vtanh.pop %v1339
        %v1468 = vtanh.pop %v1340
        %v1469 = vtanh.pop %v1341
        %v1470 = vtanh.pop %v1342
        %v1471 = vtanh.pop %v1343
        %v1472 = vtanh.pop %v1344
        %v1473 = vtanh.pop %v1345
        %v1474 = vtanh.pop %v1346
        %v1475 = vtanh.pop %v1347
        %v1476 = vtanh.pop %v1348
        %v1477 = vtanh.pop %v1349
        %v1478 = vtanh.pop %v1350
        %v1479 = vtanh.pop %v1351
        %v1480 = vtanh.pop %v1352
        %v1481 = vtanh.pop %v1353
        %v1482 = vtanh.pop %v1354
        %v1483 = vtanh.pop %v1355
        %v1484 = vtanh.pop %v1356
        %v1485 = vtanh.pop %v1357
        %v1486 = vtanh.pop %v1358
        %v1487 = vtanh.pop %v1359
        %v1488 = vtanh.pop %v1360
        %v1489 = vtanh.pop %v1361
        %v1490 = vtanh.pop %v1362
        %v1491 = vtanh.pop %v1363
        %v1492 = vtanh.pop %v1364
        %v1493 = vtanh.pop %v1365
        %v1494 = vtanh.pop %v1366
        %v1495 = vtanh.pop %v1367
        %v1496 = vtanh.pop %v1368
        %v1497 = vtanh.pop %v1369
        %v1498 = vtanh.pop %v1370
        %v1499 = vtanh.pop %v1371
        %v1500 = vtanh.pop %v1372
        %v1501 = vtanh.pop %v1373
        %v1502 = vtanh.pop %v1374
        %v1503 = vtanh.pop %v1375
        %v1504 = vtanh.pop %v1376
        %v1505 = vtanh.pop %v1377
        %v1506 = vtanh.pop %v1378
        %v1507 = vtanh.pop %v1379
        %v1508 = vtanh.pop %v1380
        %v1509 = vtanh.pop %v1381
        %v1510 = vtanh.pop %v1382
        %v1511 = vtanh.pop %v1383
        %v1512 = vtanh.pop %v1384
        %v1513 = vtanh.pop %v1385
        %v1514 = vtanh.pop %v1386
        %v1515 = vtanh.pop %v1387
        %v1516 = vtanh.pop %v1388
        %v1517 = vtanh.pop %v1389
        %v1518 = vtanh.pop %v1390
        %v1519 = vtanh.pop %v1391
        %v1520 = vtanh.pop %v1392
        %v1521 = vtanh.pop %v1393
        %v1522 = vtanh.pop %v1394
        %v1523 = vtanh.pop %v1395
        %v1524 = vtanh.pop %v1396
        %v1525 = vtanh.pop %v1397
        %v1526 = vtanh.pop %v1398
        %v1527 = vtanh.pop %v1399
        %v1528 = vtanh.pop %v1400
        %v1529 = vtanh.pop %v1401
        %v1530 = vtanh.pop %v1402
        %v1531 = vtanh.pop %v1403
        %v1532 = vtanh.pop %v1404
        %v1533 = vtanh.pop %v1405
        %v1534 = vld [vmem:[%s5] sm:$0x1]
        %v1536 = vlaneseq
        %v1537 = vshrl.u32 %v1536, 7
        %v1538 = vsub.s32 0, %v1537
        %v1539 = vrot.slane %v1534, %v1538
        %v1541 = vmul.f32 %v1406, %v1539
        %v1542 = vmul.f32 %v1407, %v1539
        %v1543 = vmul.f32 %v1408, %v1539
        %v1544 = vmul.f32 %v1409, %v1539
        %v1545 = vmul.f32 %v1410, %v1539
        %v1546 = vmul.f32 %v1411, %v1539
        %v1547 = vmul.f32 %v1412, %v1539
        %v1548 = vmul.f32 %v1413, %v1539
        %v1549 = vmul.f32 %v1414, %v1539
        %v1550 = vmul.f32 %v1415, %v1539
        %v1551 = vmul.f32 %v1416, %v1539
        %v1552 = vmul.f32 %v1417, %v1539
        %v1553 = vmul.f32 %v1418, %v1539
        %v1554 = vmul.f32 %v1419, %v1539
        %v1555 = vmul.f32 %v1420, %v1539
        %v1556 = vmul.f32 %v1421, %v1539
        %v1557 = vmul.f32 %v1422, %v1539
        %v1558 = vmul.f32 %v1423, %v1539
        %v1559 = vmul.f32 %v1424, %v1539
        %v1560 = vmul.f32 %v1425, %v1539
        %v1561 = vmul.f32 %v1426, %v1539
        %v1562 = vmul.f32 %v1427, %v1539
        %v1563 = vmul.f32 %v1428, %v1539
        %v1564 = vmul.f32 %v1429, %v1539
        %v1565 = vmul.f32 %v1430, %v1539
        %v1566 = vmul.f32 %v1431, %v1539
        %v1567 = vmul.f32 %v1432, %v1539
        %v1568 = vmul.f32 %v1433, %v1539
        %v1569 = vmul.f32 %v1434, %v1539
        %v1570 = vmul.f32 %v1435, %v1539
        %v1571 = vmul.f32 %v1436, %v1539
        %v1572 = vmul.f32 %v1437, %v1539
        %v1573 = vmul.f32 %v1438, %v1539
        %v1574 = vmul.f32 %v1439, %v1539
        %v1575 = vmul.f32 %v1440, %v1539
        %v1576 = vmul.f32 %v1441, %v1539
        %v1577 = vmul.f32 %v1442, %v1539
        %v1578 = vmul.f32 %v1443, %v1539
        %v1579 = vmul.f32 %v1444, %v1539
        %v1580 = vmul.f32 %v1445, %v1539
        %v1581 = vmul.f32 %v1446, %v1539
        %v1582 = vmul.f32 %v1447, %v1539
        %v1583 = vmul.f32 %v1448, %v1539
        %v1584 = vmul.f32 %v1449, %v1539
        %v1585 = vmul.f32 %v1450, %v1539
        %v1586 = vmul.f32 %v1451, %v1539
        %v1587 = vmul.f32 %v1452, %v1539
        %v1588 = vmul.f32 %v1453, %v1539
        %v1589 = vmul.f32 %v1454, %v1539
        %v1590 = vmul.f32 %v1455, %v1539
        %v1591 = vmul.f32 %v1456, %v1539
        %v1592 = vmul.f32 %v1457, %v1539
        %v1593 = vmul.f32 %v1458, %v1539
        %v1594 = vmul.f32 %v1459, %v1539
        %v1595 = vmul.f32 %v1460, %v1539
        %v1596 = vmul.f32 %v1461, %v1539
        %v1597 = vmul.f32 %v1462, %v1539
        %v1598 = vmul.f32 %v1463, %v1539
        %v1599 = vmul.f32 %v1464, %v1539
        %v1600 = vmul.f32 %v1465, %v1539
        %v1601 = vmul.f32 %v1466, %v1539
        %v1602 = vmul.f32 %v1467, %v1539
        %v1603 = vmul.f32 %v1468, %v1539
        %v1604 = vmul.f32 %v1469, %v1539
        %v1605 = vmul.f32 %v1470, %v1539
        %v1606 = vmul.f32 %v1471, %v1539
        %v1607 = vmul.f32 %v1472, %v1539
        %v1608 = vmul.f32 %v1473, %v1539
        %v1609 = vmul.f32 %v1474, %v1539
        %v1610 = vmul.f32 %v1475, %v1539
        %v1611 = vmul.f32 %v1476, %v1539
        %v1612 = vmul.f32 %v1477, %v1539
        %v1613 = vmul.f32 %v1478, %v1539
        %v1614 = vmul.f32 %v1479, %v1539
        %v1615 = vmul.f32 %v1480, %v1539
        %v1616 = vmul.f32 %v1481, %v1539
        %v1617 = vmul.f32 %v1482, %v1539
        %v1618 = vmul.f32 %v1483, %v1539
        %v1619 = vmul.f32 %v1484, %v1539
        %v1620 = vmul.f32 %v1485, %v1539
        %v1621 = vmul.f32 %v1486, %v1539
        %v1622 = vmul.f32 %v1487, %v1539
        %v1623 = vmul.f32 %v1488, %v1539
        %v1624 = vmul.f32 %v1489, %v1539
        %v1625 = vmul.f32 %v1490, %v1539
        %v1626 = vmul.f32 %v1491, %v1539
        %v1627 = vmul.f32 %v1492, %v1539
        %v1628 = vmul.f32 %v1493, %v1539
        %v1629 = vmul.f32 %v1494, %v1539
        %v1630 = vmul.f32 %v1495, %v1539
        %v1631 = vmul.f32 %v1496, %v1539
        %v1632 = vmul.f32 %v1497, %v1539
        %v1633 = vmul.f32 %v1498, %v1539
        %v1634 = vmul.f32 %v1499, %v1539
        %v1635 = vmul.f32 %v1500, %v1539
        %v1636 = vmul.f32 %v1501, %v1539
        %v1637 = vmul.f32 %v1502, %v1539
        %v1638 = vmul.f32 %v1503, %v1539
        %v1639 = vmul.f32 %v1504, %v1539
        %v1640 = vmul.f32 %v1505, %v1539
        %v1641 = vmul.f32 %v1506, %v1539
        %v1642 = vmul.f32 %v1507, %v1539
        %v1643 = vmul.f32 %v1508, %v1539
        %v1644 = vmul.f32 %v1509, %v1539
        %v1645 = vmul.f32 %v1510, %v1539
        %v1646 = vmul.f32 %v1511, %v1539
        %v1647 = vmul.f32 %v1512, %v1539
        %v1648 = vmul.f32 %v1513, %v1539
        %v1649 = vmul.f32 %v1514, %v1539
        %v1650 = vmul.f32 %v1515, %v1539
        %v1651 = vmul.f32 %v1516, %v1539
        %v1652 = vmul.f32 %v1517, %v1539
        %v1653 = vmul.f32 %v1518, %v1539
        %v1654 = vmul.f32 %v1519, %v1539
        %v1655 = vmul.f32 %v1520, %v1539
        %v1656 = vmul.f32 %v1521, %v1539
        %v1657 = vmul.f32 %v1522, %v1539
        %v1658 = vmul.f32 %v1523, %v1539
        %v1659 = vmul.f32 %v1524, %v1539
        %v1660 = vmul.f32 %v1525, %v1539
        %v1661 = vmul.f32 %v1526, %v1539
        %v1662 = vmul.f32 %v1527, %v1539
        %v1663 = vmul.f32 %v1528, %v1539
        %v1664 = vmul.f32 %v1529, %v1539
        %v1665 = vmul.f32 %v1530, %v1539
        %v1666 = vmul.f32 %v1531, %v1539
        %v1667 = vmul.f32 %v1532, %v1539
        %v1668 = vmul.f32 %v1533, %v1539
        %1669 = vadd.xlane.f32.xlu0 %v1541
        %v1670 = vpop.xlane.xlu0 %1669
        %1671 = vadd.xlane.f32.xlu0 %v1542
        %v1672 = vpop.xlane.xlu0 %1671
        %1673 = vadd.xlane.f32.xlu0 %v1543
        %v1674 = vpop.xlane.xlu0 %1673
        %1675 = vadd.xlane.f32.xlu0 %v1544
        %v1676 = vpop.xlane.xlu0 %1675
        %1677 = vadd.xlane.f32.xlu0 %v1545
        %v1678 = vpop.xlane.xlu0 %1677
        %1679 = vadd.xlane.f32.xlu0 %v1546
        %v1680 = vpop.xlane.xlu0 %1679
        %1681 = vadd.xlane.f32.xlu0 %v1547
        %v1682 = vpop.xlane.xlu0 %1681
        %1683 = vadd.xlane.f32.xlu0 %v1548
        %v1684 = vpop.xlane.xlu0 %1683
        %1685 = vadd.xlane.f32.xlu0 %v1549
        %v1686 = vpop.xlane.xlu0 %1685
        %1687 = vadd.xlane.f32.xlu0 %v1550
        %v1688 = vpop.xlane.xlu0 %1687
        %1689 = vadd.xlane.f32.xlu0 %v1551
        %v1690 = vpop.xlane.xlu0 %1689
        %1691 = vadd.xlane.f32.xlu0 %v1552
        %v1692 = vpop.xlane.xlu0 %1691
        %1693 = vadd.xlane.f32.xlu0 %v1553
        %v1694 = vpop.xlane.xlu0 %1693
        %1695 = vadd.xlane.f32.xlu0 %v1554
        %v1696 = vpop.xlane.xlu0 %1695
        %1697 = vadd.xlane.f32.xlu0 %v1555
        %v1698 = vpop.xlane.xlu0 %1697
        %1699 = vadd.xlane.f32.xlu0 %v1556
        %v1700 = vpop.xlane.xlu0 %1699
        %1701 = vadd.xlane.f32.xlu0 %v1557
        %v1702 = vpop.xlane.xlu0 %1701
        %1703 = vadd.xlane.f32.xlu0 %v1558
        %v1704 = vpop.xlane.xlu0 %1703
        %1705 = vadd.xlane.f32.xlu0 %v1559
        %v1706 = vpop.xlane.xlu0 %1705
        %1707 = vadd.xlane.f32.xlu0 %v1560
        %v1708 = vpop.xlane.xlu0 %1707
        %1709 = vadd.xlane.f32.xlu0 %v1561
        %v1710 = vpop.xlane.xlu0 %1709
        %1711 = vadd.xlane.f32.xlu0 %v1562
        %v1712 = vpop.xlane.xlu0 %1711
        %1713 = vadd.xlane.f32.xlu0 %v1563
        %v1714 = vpop.xlane.xlu0 %1713
        %1715 = vadd.xlane.f32.xlu0 %v1564
        %v1716 = vpop.xlane.xlu0 %1715
        %1717 = vadd.xlane.f32.xlu0 %v1565
        %v1718 = vpop.xlane.xlu0 %1717
        %1719 = vadd.xlane.f32.xlu0 %v1566
        %v1720 = vpop.xlane.xlu0 %1719
        %1721 = vadd.xlane.f32.xlu0 %v1567
        %v1722 = vpop.xlane.xlu0 %1721
        %1723 = vadd.xlane.f32.xlu0 %v1568
        %v1724 = vpop.xlane.xlu0 %1723
        %1725 = vadd.xlane.f32.xlu0 %v1569
        %v1726 = vpop.xlane.xlu0 %1725
        %1727 = vadd.xlane.f32.xlu0 %v1570
        %v1728 = vpop.xlane.xlu0 %1727
        %1729 = vadd.xlane.f32.xlu0 %v1571
        %v1730 = vpop.xlane.xlu0 %1729
        %1731 = vadd.xlane.f32.xlu0 %v1572
        %v1732 = vpop.xlane.xlu0 %1731
        %1733 = vadd.xlane.f32.xlu0 %v1573
        %v1734 = vpop.xlane.xlu0 %1733
        %1735 = vadd.xlane.f32.xlu0 %v1574
        %v1736 = vpop.xlane.xlu0 %1735
        %1737 = vadd.xlane.f32.xlu0 %v1575
        %v1738 = vpop.xlane.xlu0 %1737
        %1739 = vadd.xlane.f32.xlu0 %v1576
        %v1740 = vpop.xlane.xlu0 %1739
        %1741 = vadd.xlane.f32.xlu0 %v1577
        %v1742 = vpop.xlane.xlu0 %1741
        %1743 = vadd.xlane.f32.xlu0 %v1578
        %v1744 = vpop.xlane.xlu0 %1743
        %1745 = vadd.xlane.f32.xlu0 %v1579
        %v1746 = vpop.xlane.xlu0 %1745
        %1747 = vadd.xlane.f32.xlu0 %v1580
        %v1748 = vpop.xlane.xlu0 %1747
        %1749 = vadd.xlane.f32.xlu0 %v1581
        %v1750 = vpop.xlane.xlu0 %1749
        %1751 = vadd.xlane.f32.xlu0 %v1582
        %v1752 = vpop.xlane.xlu0 %1751
        %1753 = vadd.xlane.f32.xlu0 %v1583
        %v1754 = vpop.xlane.xlu0 %1753
        %1755 = vadd.xlane.f32.xlu0 %v1584
        %v1756 = vpop.xlane.xlu0 %1755
        %1757 = vadd.xlane.f32.xlu0 %v1585
        %v1758 = vpop.xlane.xlu0 %1757
        %1759 = vadd.xlane.f32.xlu0 %v1586
        %v1760 = vpop.xlane.xlu0 %1759
        %1761 = vadd.xlane.f32.xlu0 %v1587
        %v1762 = vpop.xlane.xlu0 %1761
        %1763 = vadd.xlane.f32.xlu0 %v1588
        %v1764 = vpop.xlane.xlu0 %1763
        %1765 = vadd.xlane.f32.xlu0 %v1589
        %v1766 = vpop.xlane.xlu0 %1765
        %1767 = vadd.xlane.f32.xlu0 %v1590
        %v1768 = vpop.xlane.xlu0 %1767
        %1769 = vadd.xlane.f32.xlu0 %v1591
        %v1770 = vpop.xlane.xlu0 %1769
        %1771 = vadd.xlane.f32.xlu0 %v1592
        %v1772 = vpop.xlane.xlu0 %1771
        %1773 = vadd.xlane.f32.xlu0 %v1593
        %v1774 = vpop.xlane.xlu0 %1773
        %1775 = vadd.xlane.f32.xlu0 %v1594
        %v1776 = vpop.xlane.xlu0 %1775
        %1777 = vadd.xlane.f32.xlu0 %v1595
        %v1778 = vpop.xlane.xlu0 %1777
        %1779 = vadd.xlane.f32.xlu0 %v1596
        %v1780 = vpop.xlane.xlu0 %1779
        %1781 = vadd.xlane.f32.xlu0 %v1597
        %v1782 = vpop.xlane.xlu0 %1781
        %1783 = vadd.xlane.f32.xlu0 %v1598
        %v1784 = vpop.xlane.xlu0 %1783
        %1785 = vadd.xlane.f32.xlu0 %v1599
        %v1786 = vpop.xlane.xlu0 %1785
        %1787 = vadd.xlane.f32.xlu0 %v1600
        %v1788 = vpop.xlane.xlu0 %1787
        %1789 = vadd.xlane.f32.xlu0 %v1601
        %v1790 = vpop.xlane.xlu0 %1789
        %1791 = vadd.xlane.f32.xlu0 %v1602
        %v1792 = vpop.xlane.xlu0 %1791
        %1793 = vadd.xlane.f32.xlu0 %v1603
        %v1794 = vpop.xlane.xlu0 %1793
        %1795 = vadd.xlane.f32.xlu0 %v1604
        %v1796 = vpop.xlane.xlu0 %1795
        %1797 = vadd.xlane.f32.xlu0 %v1605
        %v1798 = vpop.xlane.xlu0 %1797
        %1799 = vadd.xlane.f32.xlu0 %v1606
        %v1800 = vpop.xlane.xlu0 %1799
        %1801 = vadd.xlane.f32.xlu0 %v1607
        %v1802 = vpop.xlane.xlu0 %1801
        %1803 = vadd.xlane.f32.xlu0 %v1608
        %v1804 = vpop.xlane.xlu0 %1803
        %1805 = vadd.xlane.f32.xlu0 %v1609
        %v1806 = vpop.xlane.xlu0 %1805
        %1807 = vadd.xlane.f32.xlu0 %v1610
        %v1808 = vpop.xlane.xlu0 %1807
        %1809 = vadd.xlane.f32.xlu0 %v1611
        %v1810 = vpop.xlane.xlu0 %1809
        %1811 = vadd.xlane.f32.xlu0 %v1612
        %v1812 = vpop.xlane.xlu0 %1811
        %1813 = vadd.xlane.f32.xlu0 %v1613
        %v1814 = vpop.xlane.xlu0 %1813
        %1815 = vadd.xlane.f32.xlu0 %v1614
        %v1816 = vpop.xlane.xlu0 %1815
        %1817 = vadd.xlane.f32.xlu0 %v1615
        %v1818 = vpop.xlane.xlu0 %1817
        %1819 = vadd.xlane.f32.xlu0 %v1616
        %v1820 = vpop.xlane.xlu0 %1819
        %1821 = vadd.xlane.f32.xlu0 %v1617
        %v1822 = vpop.xlane.xlu0 %1821
        %1823 = vadd.xlane.f32.xlu0 %v1618
        %v1824 = vpop.xlane.xlu0 %1823
        %1825 = vadd.xlane.f32.xlu0 %v1619
        %v1826 = vpop.xlane.xlu0 %1825
        %1827 = vadd.xlane.f32.xlu0 %v1620
        %v1828 = vpop.xlane.xlu0 %1827
        %1829 = vadd.xlane.f32.xlu0 %v1621
        %v1830 = vpop.xlane.xlu0 %1829
        %1831 = vadd.xlane.f32.xlu0 %v1622
        %v1832 = vpop.xlane.xlu0 %1831
        %1833 = vadd.xlane.f32.xlu0 %v1623
        %v1834 = vpop.xlane.xlu0 %1833
        %1835 = vadd.xlane.f32.xlu0 %v1624
        %v1836 = vpop.xlane.xlu0 %1835
        %1837 = vadd.xlane.f32.xlu0 %v1625
        %v1838 = vpop.xlane.xlu0 %1837
        %1839 = vadd.xlane.f32.xlu0 %v1626
        %v1840 = vpop.xlane.xlu0 %1839
        %1841 = vadd.xlane.f32.xlu0 %v1627
        %v1842 = vpop.xlane.xlu0 %1841
        %1843 = vadd.xlane.f32.xlu0 %v1628
        %v1844 = vpop.xlane.xlu0 %1843
        %1845 = vadd.xlane.f32.xlu0 %v1629
        %v1846 = vpop.xlane.xlu0 %1845
        %1847 = vadd.xlane.f32.xlu0 %v1630
        %v1848 = vpop.xlane.xlu0 %1847
        %1849 = vadd.xlane.f32.xlu0 %v1631
        %v1850 = vpop.xlane.xlu0 %1849
        %1851 = vadd.xlane.f32.xlu0 %v1632
        %v1852 = vpop.xlane.xlu0 %1851
        %1853 = vadd.xlane.f32.xlu0 %v1633
        %v1854 = vpop.xlane.xlu0 %1853
        %1855 = vadd.xlane.f32.xlu0 %v1634
        %v1856 = vpop.xlane.xlu0 %1855
        %1857 = vadd.xlane.f32.xlu0 %v1635
        %v1858 = vpop.xlane.xlu0 %1857
        %1859 = vadd.xlane.f32.xlu0 %v1636
        %v1860 = vpop.xlane.xlu0 %1859
        %1861 = vadd.xlane.f32.xlu0 %v1637
        %v1862 = vpop.xlane.xlu0 %1861
        %1863 = vadd.xlane.f32.xlu0 %v1638
        %v1864 = vpop.xlane.xlu0 %1863
        %1865 = vadd.xlane.f32.xlu0 %v1639
        %v1866 = vpop.xlane.xlu0 %1865
        %1867 = vadd.xlane.f32.xlu0 %v1640
        %v1868 = vpop.xlane.xlu0 %1867
        %1869 = vadd.xlane.f32.xlu0 %v1641
        %v1870 = vpop.xlane.xlu0 %1869
        %1871 = vadd.xlane.f32.xlu0 %v1642
        %v1872 = vpop.xlane.xlu0 %1871
        %1873 = vadd.xlane.f32.xlu0 %v1643
        %v1874 = vpop.xlane.xlu0 %1873
        %1875 = vadd.xlane.f32.xlu0 %v1644
        %v1876 = vpop.xlane.xlu0 %1875
        %1877 = vadd.xlane.f32.xlu0 %v1645
        %v1878 = vpop.xlane.xlu0 %1877
        %1879 = vadd.xlane.f32.xlu0 %v1646
        %v1880 = vpop.xlane.xlu0 %1879
        %1881 = vadd.xlane.f32.xlu0 %v1647
        %v1882 = vpop.xlane.xlu0 %1881
        %1883 = vadd.xlane.f32.xlu0 %v1648
        %v1884 = vpop.xlane.xlu0 %1883
        %1885 = vadd.xlane.f32.xlu0 %v1649
        %v1886 = vpop.xlane.xlu0 %1885
        %1887 = vadd.xlane.f32.xlu0 %v1650
        %v1888 = vpop.xlane.xlu0 %1887
        %1889 = vadd.xlane.f32.xlu0 %v1651
        %v1890 = vpop.xlane.xlu0 %1889
        %1891 = vadd.xlane.f32.xlu0 %v1652
        %v1892 = vpop.xlane.xlu0 %1891
        %1893 = vadd.xlane.f32.xlu0 %v1653
        %v1894 = vpop.xlane.xlu0 %1893
        %1895 = vadd.xlane.f32.xlu0 %v1654
        %v1896 = vpop.xlane.xlu0 %1895
        %1897 = vadd.xlane.f32.xlu0 %v1655
        %v1898 = vpop.xlane.xlu0 %1897
        %1899 = vadd.xlane.f32.xlu0 %v1656
        %v1900 = vpop.xlane.xlu0 %1899
        %1901 = vadd.xlane.f32.xlu0 %v1657
        %v1902 = vpop.xlane.xlu0 %1901
        %1903 = vadd.xlane.f32.xlu0 %v1658
        %v1904 = vpop.xlane.xlu0 %1903
        %1905 = vadd.xlane.f32.xlu0 %v1659
        %v1906 = vpop.xlane.xlu0 %1905
        %1907 = vadd.xlane.f32.xlu0 %v1660
        %v1908 = vpop.xlane.xlu0 %1907
        %1909 = vadd.xlane.f32.xlu0 %v1661
        %v1910 = vpop.xlane.xlu0 %1909
        %1911 = vadd.xlane.f32.xlu0 %v1662
        %v1912 = vpop.xlane.xlu0 %1911
        %1913 = vadd.xlane.f32.xlu0 %v1663
        %v1914 = vpop.xlane.xlu0 %1913
        %1915 = vadd.xlane.f32.xlu0 %v1664
        %v1916 = vpop.xlane.xlu0 %1915
        %1917 = vadd.xlane.f32.xlu0 %v1665
        %v1918 = vpop.xlane.xlu0 %1917
        %1919 = vadd.xlane.f32.xlu0 %v1666
        %v1920 = vpop.xlane.xlu0 %1919
        %1921 = vadd.xlane.f32.xlu0 %v1667
        %v1922 = vpop.xlane.xlu0 %1921
        %1923 = vadd.xlane.f32.xlu0 %v1668
        %v1924 = vpop.xlane.xlu0 %1923
        %v1925 = vlaneseq
        %v1926 = vshrl.u32 %v1925, 7
        %v1927 = vlaneseq
        %v1928 = vand.u32 %v1927, 127
        %vm1929 = vcmp.eq.s32.totalorder %v1926, %v1928
        %v1930 = vsel %vm1929, 1, 0
        %v1931 = vcvt.s32.f32 %v1930
        %v2060 = vlaneseq
        %v2061 = vshrl.u32 %v2060, 7
        %v2062 = vsub.s32 %v1928, %v2061
        %v2063 = vrot.slane %v1670, %v2062
        %v2064 = vlaneseq
        %v2065 = vshrl.u32 %v2064, 7
        %v2066 = vsub.s32 %v1928, %v2065
        %v2067 = vrot.slane %v1672, %v2066
        %v2068 = vlaneseq
        %v2069 = vshrl.u32 %v2068, 7
        %v2070 = vsub.s32 %v1928, %v2069
        %v2071 = vrot.slane %v1674, %v2070
        %v2072 = vlaneseq
        %v2073 = vshrl.u32 %v2072, 7
        %v2074 = vsub.s32 %v1928, %v2073
        %v2075 = vrot.slane %v1676, %v2074
        %v2076 = vlaneseq
        %v2077 = vshrl.u32 %v2076, 7
        %v2078 = vsub.s32 %v1928, %v2077
        %v2079 = vrot.slane %v1678, %v2078
        %v2080 = vlaneseq
        %v2081 = vshrl.u32 %v2080, 7
        %v2082 = vsub.s32 %v1928, %v2081
        %v2083 = vrot.slane %v1680, %v2082
        %v2084 = vlaneseq
        %v2085 = vshrl.u32 %v2084, 7
        %v2086 = vsub.s32 %v1928, %v2085
        %v2087 = vrot.slane %v1682, %v2086
        %v2088 = vlaneseq
        %v2089 = vshrl.u32 %v2088, 7
        %v2090 = vsub.s32 %v1928, %v2089
        %v2091 = vrot.slane %v1684, %v2090
        %v2092 = vlaneseq
        %v2093 = vshrl.u32 %v2092, 7
        %v2094 = vsub.s32 %v1928, %v2093
        %v2095 = vrot.slane %v1686, %v2094
        %v2096 = vlaneseq
        %v2097 = vshrl.u32 %v2096, 7
        %v2098 = vsub.s32 %v1928, %v2097
        %v2099 = vrot.slane %v1688, %v2098
        %v2100 = vlaneseq
        %v2101 = vshrl.u32 %v2100, 7
        %v2102 = vsub.s32 %v1928, %v2101
        %v2103 = vrot.slane %v1690, %v2102
        %v2104 = vlaneseq
        %v2105 = vshrl.u32 %v2104, 7
        %v2106 = vsub.s32 %v1928, %v2105
        %v2107 = vrot.slane %v1692, %v2106
        %v2108 = vlaneseq
        %v2109 = vshrl.u32 %v2108, 7
        %v2110 = vsub.s32 %v1928, %v2109
        %v2111 = vrot.slane %v1694, %v2110
        %v2112 = vlaneseq
        %v2113 = vshrl.u32 %v2112, 7
        %v2114 = vsub.s32 %v1928, %v2113
        %v2115 = vrot.slane %v1696, %v2114
        %v2116 = vlaneseq
        %v2117 = vshrl.u32 %v2116, 7
        %v2118 = vsub.s32 %v1928, %v2117
        %v2119 = vrot.slane %v1698, %v2118
        %v2120 = vlaneseq
        %v2121 = vshrl.u32 %v2120, 7
        %v2122 = vsub.s32 %v1928, %v2121
        %v2123 = vrot.slane %v1700, %v2122
        %v2124 = vlaneseq
        %v2125 = vshrl.u32 %v2124, 7
        %v2126 = vsub.s32 %v1928, %v2125
        %v2127 = vrot.slane %v1702, %v2126
        %v2128 = vlaneseq
        %v2129 = vshrl.u32 %v2128, 7
        %v2130 = vsub.s32 %v1928, %v2129
        %v2131 = vrot.slane %v1704, %v2130
        %v2132 = vlaneseq
        %v2133 = vshrl.u32 %v2132, 7
        %v2134 = vsub.s32 %v1928, %v2133
        %v2135 = vrot.slane %v1706, %v2134
        %v2136 = vlaneseq
        %v2137 = vshrl.u32 %v2136, 7
        %v2138 = vsub.s32 %v1928, %v2137
        %v2139 = vrot.slane %v1708, %v2138
        %v2140 = vlaneseq
        %v2141 = vshrl.u32 %v2140, 7
        %v2142 = vsub.s32 %v1928, %v2141
        %v2143 = vrot.slane %v1710, %v2142
        %v2144 = vlaneseq
        %v2145 = vshrl.u32 %v2144, 7
        %v2146 = vsub.s32 %v1928, %v2145
        %v2147 = vrot.slane %v1712, %v2146
        %v2148 = vlaneseq
        %v2149 = vshrl.u32 %v2148, 7
        %v2150 = vsub.s32 %v1928, %v2149
        %v2151 = vrot.slane %v1714, %v2150
        %v2152 = vlaneseq
        %v2153 = vshrl.u32 %v2152, 7
        %v2154 = vsub.s32 %v1928, %v2153
        %v2155 = vrot.slane %v1716, %v2154
        %v2156 = vlaneseq
        %v2157 = vshrl.u32 %v2156, 7
        %v2158 = vsub.s32 %v1928, %v2157
        %v2159 = vrot.slane %v1718, %v2158
        %v2160 = vlaneseq
        %v2161 = vshrl.u32 %v2160, 7
        %v2162 = vsub.s32 %v1928, %v2161
        %v2163 = vrot.slane %v1720, %v2162
        %v2164 = vlaneseq
        %v2165 = vshrl.u32 %v2164, 7
        %v2166 = vsub.s32 %v1928, %v2165
        %v2167 = vrot.slane %v1722, %v2166
        %v2168 = vlaneseq
        %v2169 = vshrl.u32 %v2168, 7
        %v2170 = vsub.s32 %v1928, %v2169
        %v2171 = vrot.slane %v1724, %v2170
        %v2172 = vlaneseq
        %v2173 = vshrl.u32 %v2172, 7
        %v2174 = vsub.s32 %v1928, %v2173
        %v2175 = vrot.slane %v1726, %v2174
        %v2176 = vlaneseq
        %v2177 = vshrl.u32 %v2176, 7
        %v2178 = vsub.s32 %v1928, %v2177
        %v2179 = vrot.slane %v1728, %v2178
        %v2180 = vlaneseq
        %v2181 = vshrl.u32 %v2180, 7
        %v2182 = vsub.s32 %v1928, %v2181
        %v2183 = vrot.slane %v1730, %v2182
        %v2184 = vlaneseq
        %v2185 = vshrl.u32 %v2184, 7
        %v2186 = vsub.s32 %v1928, %v2185
        %v2187 = vrot.slane %v1732, %v2186
        %v2188 = vlaneseq
        %v2189 = vshrl.u32 %v2188, 7
        %v2190 = vsub.s32 %v1928, %v2189
        %v2191 = vrot.slane %v1734, %v2190
        %v2192 = vlaneseq
        %v2193 = vshrl.u32 %v2192, 7
        %v2194 = vsub.s32 %v1928, %v2193
        %v2195 = vrot.slane %v1736, %v2194
        %v2196 = vlaneseq
        %v2197 = vshrl.u32 %v2196, 7
        %v2198 = vsub.s32 %v1928, %v2197
        %v2199 = vrot.slane %v1738, %v2198
        %v2200 = vlaneseq
        %v2201 = vshrl.u32 %v2200, 7
        %v2202 = vsub.s32 %v1928, %v2201
        %v2203 = vrot.slane %v1740, %v2202
        %v2204 = vlaneseq
        %v2205 = vshrl.u32 %v2204, 7
        %v2206 = vsub.s32 %v1928, %v2205
        %v2207 = vrot.slane %v1742, %v2206
        %v2208 = vlaneseq
        %v2209 = vshrl.u32 %v2208, 7
        %v2210 = vsub.s32 %v1928, %v2209
        %v2211 = vrot.slane %v1744, %v2210
        %v2212 = vlaneseq
        %v2213 = vshrl.u32 %v2212, 7
        %v2214 = vsub.s32 %v1928, %v2213
        %v2215 = vrot.slane %v1746, %v2214
        %v2216 = vlaneseq
        %v2217 = vshrl.u32 %v2216, 7
        %v2218 = vsub.s32 %v1928, %v2217
        %v2219 = vrot.slane %v1748, %v2218
        %v2220 = vlaneseq
        %v2221 = vshrl.u32 %v2220, 7
        %v2222 = vsub.s32 %v1928, %v2221
        %v2223 = vrot.slane %v1750, %v2222
        %v2224 = vlaneseq
        %v2225 = vshrl.u32 %v2224, 7
        %v2226 = vsub.s32 %v1928, %v2225
        %v2227 = vrot.slane %v1752, %v2226
        %v2228 = vlaneseq
        %v2229 = vshrl.u32 %v2228, 7
        %v2230 = vsub.s32 %v1928, %v2229
        %v2231 = vrot.slane %v1754, %v2230
        %v2232 = vlaneseq
        %v2233 = vshrl.u32 %v2232, 7
        %v2234 = vsub.s32 %v1928, %v2233
        %v2235 = vrot.slane %v1756, %v2234
        %v2236 = vlaneseq
        %v2237 = vshrl.u32 %v2236, 7
        %v2238 = vsub.s32 %v1928, %v2237
        %v2239 = vrot.slane %v1758, %v2238
        %v2240 = vlaneseq
        %v2241 = vshrl.u32 %v2240, 7
        %v2242 = vsub.s32 %v1928, %v2241
        %v2243 = vrot.slane %v1760, %v2242
        %v2244 = vlaneseq
        %v2245 = vshrl.u32 %v2244, 7
        %v2246 = vsub.s32 %v1928, %v2245
        %v2247 = vrot.slane %v1762, %v2246
        %v2248 = vlaneseq
        %v2249 = vshrl.u32 %v2248, 7
        %v2250 = vsub.s32 %v1928, %v2249
        %v2251 = vrot.slane %v1764, %v2250
        %v2252 = vlaneseq
        %v2253 = vshrl.u32 %v2252, 7
        %v2254 = vsub.s32 %v1928, %v2253
        %v2255 = vrot.slane %v1766, %v2254
        %v2256 = vlaneseq
        %v2257 = vshrl.u32 %v2256, 7
        %v2258 = vsub.s32 %v1928, %v2257
        %v2259 = vrot.slane %v1768, %v2258
        %v2260 = vlaneseq
        %v2261 = vshrl.u32 %v2260, 7
        %v2262 = vsub.s32 %v1928, %v2261
        %v2263 = vrot.slane %v1770, %v2262
        %v2264 = vlaneseq
        %v2265 = vshrl.u32 %v2264, 7
        %v2266 = vsub.s32 %v1928, %v2265
        %v2267 = vrot.slane %v1772, %v2266
        %v2268 = vlaneseq
        %v2269 = vshrl.u32 %v2268, 7
        %v2270 = vsub.s32 %v1928, %v2269
        %v2271 = vrot.slane %v1774, %v2270
        %v2272 = vlaneseq
        %v2273 = vshrl.u32 %v2272, 7
        %v2274 = vsub.s32 %v1928, %v2273
        %v2275 = vrot.slane %v1776, %v2274
        %v2276 = vlaneseq
        %v2277 = vshrl.u32 %v2276, 7
        %v2278 = vsub.s32 %v1928, %v2277
        %v2279 = vrot.slane %v1778, %v2278
        %v2280 = vlaneseq
        %v2281 = vshrl.u32 %v2280, 7
        %v2282 = vsub.s32 %v1928, %v2281
        %v2283 = vrot.slane %v1780, %v2282
        %v2284 = vlaneseq
        %v2285 = vshrl.u32 %v2284, 7
        %v2286 = vsub.s32 %v1928, %v2285
        %v2287 = vrot.slane %v1782, %v2286
        %v2288 = vlaneseq
        %v2289 = vshrl.u32 %v2288, 7
        %v2290 = vsub.s32 %v1928, %v2289
        %v2291 = vrot.slane %v1784, %v2290
        %v2292 = vlaneseq
        %v2293 = vshrl.u32 %v2292, 7
        %v2294 = vsub.s32 %v1928, %v2293
        %v2295 = vrot.slane %v1786, %v2294
        %v2296 = vlaneseq
        %v2297 = vshrl.u32 %v2296, 7
        %v2298 = vsub.s32 %v1928, %v2297
        %v2299 = vrot.slane %v1788, %v2298
        %v2300 = vlaneseq
        %v2301 = vshrl.u32 %v2300, 7
        %v2302 = vsub.s32 %v1928, %v2301
        %v2303 = vrot.slane %v1790, %v2302
        %v2304 = vlaneseq
        %v2305 = vshrl.u32 %v2304, 7
        %v2306 = vsub.s32 %v1928, %v2305
        %v2307 = vrot.slane %v1792, %v2306
        %v2308 = vlaneseq
        %v2309 = vshrl.u32 %v2308, 7
        %v2310 = vsub.s32 %v1928, %v2309
        %v2311 = vrot.slane %v1794, %v2310
        %v2312 = vlaneseq
        %v2313 = vshrl.u32 %v2312, 7
        %v2314 = vsub.s32 %v1928, %v2313
        %v2315 = vrot.slane %v1796, %v2314
        %v2316 = vlaneseq
        %v2317 = vshrl.u32 %v2316, 7
        %v2318 = vsub.s32 %v1928, %v2317
        %v2319 = vrot.slane %v1798, %v2318
        %v2320 = vlaneseq
        %v2321 = vshrl.u32 %v2320, 7
        %v2322 = vsub.s32 %v1928, %v2321
        %v2323 = vrot.slane %v1800, %v2322
        %v2324 = vlaneseq
        %v2325 = vshrl.u32 %v2324, 7
        %v2326 = vsub.s32 %v1928, %v2325
        %v2327 = vrot.slane %v1802, %v2326
        %v2328 = vlaneseq
        %v2329 = vshrl.u32 %v2328, 7
        %v2330 = vsub.s32 %v1928, %v2329
        %v2331 = vrot.slane %v1804, %v2330
        %v2332 = vlaneseq
        %v2333 = vshrl.u32 %v2332, 7
        %v2334 = vsub.s32 %v1928, %v2333
        %v2335 = vrot.slane %v1806, %v2334
        %v2336 = vlaneseq
        %v2337 = vshrl.u32 %v2336, 7
        %v2338 = vsub.s32 %v1928, %v2337
        %v2339 = vrot.slane %v1808, %v2338
        %v2340 = vlaneseq
        %v2341 = vshrl.u32 %v2340, 7
        %v2342 = vsub.s32 %v1928, %v2341
        %v2343 = vrot.slane %v1810, %v2342
        %v2344 = vlaneseq
        %v2345 = vshrl.u32 %v2344, 7
        %v2346 = vsub.s32 %v1928, %v2345
        %v2347 = vrot.slane %v1812, %v2346
        %v2348 = vlaneseq
        %v2349 = vshrl.u32 %v2348, 7
        %v2350 = vsub.s32 %v1928, %v2349
        %v2351 = vrot.slane %v1814, %v2350
        %v2352 = vlaneseq
        %v2353 = vshrl.u32 %v2352, 7
        %v2354 = vsub.s32 %v1928, %v2353
        %v2355 = vrot.slane %v1816, %v2354
        %v2356 = vlaneseq
        %v2357 = vshrl.u32 %v2356, 7
        %v2358 = vsub.s32 %v1928, %v2357
        %v2359 = vrot.slane %v1818, %v2358
        %v2360 = vlaneseq
        %v2361 = vshrl.u32 %v2360, 7
        %v2362 = vsub.s32 %v1928, %v2361
        %v2363 = vrot.slane %v1820, %v2362
        %v2364 = vlaneseq
        %v2365 = vshrl.u32 %v2364, 7
        %v2366 = vsub.s32 %v1928, %v2365
        %v2367 = vrot.slane %v1822, %v2366
        %v2368 = vlaneseq
        %v2369 = vshrl.u32 %v2368, 7
        %v2370 = vsub.s32 %v1928, %v2369
        %v2371 = vrot.slane %v1824, %v2370
        %v2372 = vlaneseq
        %v2373 = vshrl.u32 %v2372, 7
        %v2374 = vsub.s32 %v1928, %v2373
        %v2375 = vrot.slane %v1826, %v2374
        %v2376 = vlaneseq
        %v2377 = vshrl.u32 %v2376, 7
        %v2378 = vsub.s32 %v1928, %v2377
        %v2379 = vrot.slane %v1828, %v2378
        %v2380 = vlaneseq
        %v2381 = vshrl.u32 %v2380, 7
        %v2382 = vsub.s32 %v1928, %v2381
        %v2383 = vrot.slane %v1830, %v2382
        %v2384 = vlaneseq
        %v2385 = vshrl.u32 %v2384, 7
        %v2386 = vsub.s32 %v1928, %v2385
        %v2387 = vrot.slane %v1832, %v2386
        %v2388 = vlaneseq
        %v2389 = vshrl.u32 %v2388, 7
        %v2390 = vsub.s32 %v1928, %v2389
        %v2391 = vrot.slane %v1834, %v2390
        %v2392 = vlaneseq
        %v2393 = vshrl.u32 %v2392, 7
        %v2394 = vsub.s32 %v1928, %v2393
        %v2395 = vrot.slane %v1836, %v2394
        %v2396 = vlaneseq
        %v2397 = vshrl.u32 %v2396, 7
        %v2398 = vsub.s32 %v1928, %v2397
        %v2399 = vrot.slane %v1838, %v2398
        %v2400 = vlaneseq
        %v2401 = vshrl.u32 %v2400, 7
        %v2402 = vsub.s32 %v1928, %v2401
        %v2403 = vrot.slane %v1840, %v2402
        %v2404 = vlaneseq
        %v2405 = vshrl.u32 %v2404, 7
        %v2406 = vsub.s32 %v1928, %v2405
        %v2407 = vrot.slane %v1842, %v2406
        %v2408 = vlaneseq
        %v2409 = vshrl.u32 %v2408, 7
        %v2410 = vsub.s32 %v1928, %v2409
        %v2411 = vrot.slane %v1844, %v2410
        %v2412 = vlaneseq
        %v2413 = vshrl.u32 %v2412, 7
        %v2414 = vsub.s32 %v1928, %v2413
        %v2415 = vrot.slane %v1846, %v2414
        %v2416 = vlaneseq
        %v2417 = vshrl.u32 %v2416, 7
        %v2418 = vsub.s32 %v1928, %v2417
        %v2419 = vrot.slane %v1848, %v2418
        %v2420 = vlaneseq
        %v2421 = vshrl.u32 %v2420, 7
        %v2422 = vsub.s32 %v1928, %v2421
        %v2423 = vrot.slane %v1850, %v2422
        %v2424 = vlaneseq
        %v2425 = vshrl.u32 %v2424, 7
        %v2426 = vsub.s32 %v1928, %v2425
        %v2427 = vrot.slane %v1852, %v2426
        %v2428 = vlaneseq
        %v2429 = vshrl.u32 %v2428, 7
        %v2430 = vsub.s32 %v1928, %v2429
        %v2431 = vrot.slane %v1854, %v2430
        %v2432 = vlaneseq
        %v2433 = vshrl.u32 %v2432, 7
        %v2434 = vsub.s32 %v1928, %v2433
        %v2435 = vrot.slane %v1856, %v2434
        %v2436 = vlaneseq
        %v2437 = vshrl.u32 %v2436, 7
        %v2438 = vsub.s32 %v1928, %v2437
        %v2439 = vrot.slane %v1858, %v2438
        %v2440 = vlaneseq
        %v2441 = vshrl.u32 %v2440, 7
        %v2442 = vsub.s32 %v1928, %v2441
        %v2443 = vrot.slane %v1860, %v2442
        %v2444 = vlaneseq
        %v2445 = vshrl.u32 %v2444, 7
        %v2446 = vsub.s32 %v1928, %v2445
        %v2447 = vrot.slane %v1862, %v2446
        %v2448 = vlaneseq
        %v2449 = vshrl.u32 %v2448, 7
        %v2450 = vsub.s32 %v1928, %v2449
        %v2451 = vrot.slane %v1864, %v2450
        %v2452 = vlaneseq
        %v2453 = vshrl.u32 %v2452, 7
        %v2454 = vsub.s32 %v1928, %v2453
        %v2455 = vrot.slane %v1866, %v2454
        %v2456 = vlaneseq
        %v2457 = vshrl.u32 %v2456, 7
        %v2458 = vsub.s32 %v1928, %v2457
        %v2459 = vrot.slane %v1868, %v2458
        %v2460 = vlaneseq
        %v2461 = vshrl.u32 %v2460, 7
        %v2462 = vsub.s32 %v1928, %v2461
        %v2463 = vrot.slane %v1870, %v2462
        %v2464 = vlaneseq
        %v2465 = vshrl.u32 %v2464, 7
        %v2466 = vsub.s32 %v1928, %v2465
        %v2467 = vrot.slane %v1872, %v2466
        %v2468 = vlaneseq
        %v2469 = vshrl.u32 %v2468, 7
        %v2470 = vsub.s32 %v1928, %v2469
        %v2471 = vrot.slane %v1874, %v2470
        %v2472 = vlaneseq
        %v2473 = vshrl.u32 %v2472, 7
        %v2474 = vsub.s32 %v1928, %v2473
        %v2475 = vrot.slane %v1876, %v2474
        %v2476 = vlaneseq
        %v2477 = vshrl.u32 %v2476, 7
        %v2478 = vsub.s32 %v1928, %v2477
        %v2479 = vrot.slane %v1878, %v2478
        %v2480 = vlaneseq
        %v2481 = vshrl.u32 %v2480, 7
        %v2482 = vsub.s32 %v1928, %v2481
        %v2483 = vrot.slane %v1880, %v2482
        %v2484 = vlaneseq
        %v2485 = vshrl.u32 %v2484, 7
        %v2486 = vsub.s32 %v1928, %v2485
        %v2487 = vrot.slane %v1882, %v2486
        %v2488 = vlaneseq
        %v2489 = vshrl.u32 %v2488, 7
        %v2490 = vsub.s32 %v1928, %v2489
        %v2491 = vrot.slane %v1884, %v2490
        %v2492 = vlaneseq
        %v2493 = vshrl.u32 %v2492, 7
        %v2494 = vsub.s32 %v1928, %v2493
        %v2495 = vrot.slane %v1886, %v2494
        %v2496 = vlaneseq
        %v2497 = vshrl.u32 %v2496, 7
        %v2498 = vsub.s32 %v1928, %v2497
        %v2499 = vrot.slane %v1888, %v2498
        %v2500 = vlaneseq
        %v2501 = vshrl.u32 %v2500, 7
        %v2502 = vsub.s32 %v1928, %v2501
        %v2503 = vrot.slane %v1890, %v2502
        %v2504 = vlaneseq
        %v2505 = vshrl.u32 %v2504, 7
        %v2506 = vsub.s32 %v1928, %v2505
        %v2507 = vrot.slane %v1892, %v2506
        %v2508 = vlaneseq
        %v2509 = vshrl.u32 %v2508, 7
        %v2510 = vsub.s32 %v1928, %v2509
        %v2511 = vrot.slane %v1894, %v2510
        %v2512 = vlaneseq
        %v2513 = vshrl.u32 %v2512, 7
        %v2514 = vsub.s32 %v1928, %v2513
        %v2515 = vrot.slane %v1896, %v2514
        %v2516 = vlaneseq
        %v2517 = vshrl.u32 %v2516, 7
        %v2518 = vsub.s32 %v1928, %v2517
        %v2519 = vrot.slane %v1898, %v2518
        %v2520 = vlaneseq
        %v2521 = vshrl.u32 %v2520, 7
        %v2522 = vsub.s32 %v1928, %v2521
        %v2523 = vrot.slane %v1900, %v2522
        %v2524 = vlaneseq
        %v2525 = vshrl.u32 %v2524, 7
        %v2526 = vsub.s32 %v1928, %v2525
        %v2527 = vrot.slane %v1902, %v2526
        %v2528 = vlaneseq
        %v2529 = vshrl.u32 %v2528, 7
        %v2530 = vsub.s32 %v1928, %v2529
        %v2531 = vrot.slane %v1904, %v2530
        %v2532 = vlaneseq
        %v2533 = vshrl.u32 %v2532, 7
        %v2534 = vsub.s32 %v1928, %v2533
        %v2535 = vrot.slane %v1906, %v2534
        %v2536 = vlaneseq
        %v2537 = vshrl.u32 %v2536, 7
        %v2538 = vsub.s32 %v1928, %v2537
        %v2539 = vrot.slane %v1908, %v2538
        %v2540 = vlaneseq
        %v2541 = vshrl.u32 %v2540, 7
        %v2542 = vsub.s32 %v1928, %v2541
        %v2543 = vrot.slane %v1910, %v2542
        %v2544 = vlaneseq
        %v2545 = vshrl.u32 %v2544, 7
        %v2546 = vsub.s32 %v1928, %v2545
        %v2547 = vrot.slane %v1912, %v2546
        %v2548 = vlaneseq
        %v2549 = vshrl.u32 %v2548, 7
        %v2550 = vsub.s32 %v1928, %v2549
        %v2551 = vrot.slane %v1914, %v2550
        %v2552 = vlaneseq
        %v2553 = vshrl.u32 %v2552, 7
        %v2554 = vsub.s32 %v1928, %v2553
        %v2555 = vrot.slane %v1916, %v2554
        %v2556 = vlaneseq
        %v2557 = vshrl.u32 %v2556, 7
        %v2558 = vsub.s32 %v1928, %v2557
        %v2559 = vrot.slane %v1918, %v2558
        %v2560 = vlaneseq
        %v2561 = vshrl.u32 %v2560, 7
        %v2562 = vsub.s32 %v1928, %v2561
        %v2563 = vrot.slane %v1920, %v2562
        %v2564 = vlaneseq
        %v2565 = vshrl.u32 %v2564, 7
        %v2566 = vsub.s32 %v1928, %v2565
        %v2567 = vrot.slane %v1922, %v2566
        %v2568 = vlaneseq
        %v2569 = vshrl.u32 %v2568, 7
        %v2570 = vsub.s32 %v1928, %v2569
        %v2571 = vrot.slane %v1924, %v2570
        %vm2572 = vcmask 1041409
        %v2573 = vsel %vm2572, %v2067, %v2063
        %vm2574 = vcmask 1042434
        %v2575 = vsel %vm2574, %v2071, %v2573
        %vm2576 = vcmask 1043459
        %v2577 = vsel %vm2576, %v2075, %v2575
        %vm2578 = vcmask 1044484
        %v2579 = vsel %vm2578, %v2079, %v2577
        %vm2580 = vcmask 1045509
        %v2581 = vsel %vm2580, %v2083, %v2579
        %vm2582 = vcmask 1046534
        %v2583 = vsel %vm2582, %v2087, %v2581
        %vm2584 = vcmask 1047559
        %v2585 = vsel %vm2584, %v2091, %v2583
        %v2586 = vsel %vm2572, %v2099, %v2095
        %v2587 = vsel %vm2574, %v2103, %v2586
        %v2588 = vsel %vm2576, %v2107, %v2587
        %v2589 = vsel %vm2578, %v2111, %v2588
        %v2590 = vsel %vm2580, %v2115, %v2589
        %v2591 = vsel %vm2582, %v2119, %v2590
        %v2592 = vsel %vm2584, %v2123, %v2591
        %v2593 = vsel %vm2572, %v2131, %v2127
        %v2594 = vsel %vm2574, %v2135, %v2593
        %v2595 = vsel %vm2576, %v2139, %v2594
        %v2596 = vsel %vm2578, %v2143, %v2595
        %v2597 = vsel %vm2580, %v2147, %v2596
        %v2598 = vsel %vm2582, %v2151, %v2597
        %v2599 = vsel %vm2584, %v2155, %v2598
        %v2600 = vsel %vm2572, %v2163, %v2159
        %v2601 = vsel %vm2574, %v2167, %v2600
        %v2602 = vsel %vm2576, %v2171, %v2601
        %v2603 = vsel %vm2578, %v2175, %v2602
        %v2604 = vsel %vm2580, %v2179, %v2603
        %v2605 = vsel %vm2582, %v2183, %v2604
        %v2606 = vsel %vm2584, %v2187, %v2605
        %v2607 = vsel %vm2572, %v2195, %v2191
        %v2608 = vsel %vm2574, %v2199, %v2607
        %v2609 = vsel %vm2576, %v2203, %v2608
        %v2610 = vsel %vm2578, %v2207, %v2609
        %v2611 = vsel %vm2580, %v2211, %v2610
        %v2612 = vsel %vm2582, %v2215, %v2611
        %v2613 = vsel %vm2584, %v2219, %v2612
        %v2614 = vsel %vm2572, %v2227, %v2223
        %v2615 = vsel %vm2574, %v2231, %v2614
        %v2616 = vsel %vm2576, %v2235, %v2615
        %v2617 = vsel %vm2578, %v2239, %v2616
        %v2618 = vsel %vm2580, %v2243, %v2617
        %v2619 = vsel %vm2582, %v2247, %v2618
        %v2620 = vsel %vm2584, %v2251, %v2619
        %v2621 = vsel %vm2572, %v2259, %v2255
        %v2622 = vsel %vm2574, %v2263, %v2621
        %v2623 = vsel %vm2576, %v2267, %v2622
        %v2624 = vsel %vm2578, %v2271, %v2623
        %v2625 = vsel %vm2580, %v2275, %v2624
        %v2626 = vsel %vm2582, %v2279, %v2625
        %v2627 = vsel %vm2584, %v2283, %v2626
        %v2628 = vsel %vm2572, %v2291, %v2287
        %v2629 = vsel %vm2574, %v2295, %v2628
        %v2630 = vsel %vm2576, %v2299, %v2629
        %v2631 = vsel %vm2578, %v2303, %v2630
        %v2632 = vsel %vm2580, %v2307, %v2631
        %v2633 = vsel %vm2582, %v2311, %v2632
        %v2634 = vsel %vm2584, %v2315, %v2633
        %v2635 = vsel %vm2572, %v2323, %v2319
        %v2636 = vsel %vm2574, %v2327, %v2635
        %v2637 = vsel %vm2576, %v2331, %v2636
        %v2638 = vsel %vm2578, %v2335, %v2637
        %v2639 = vsel %vm2580, %v2339, %v2638
        %v2640 = vsel %vm2582, %v2343, %v2639
        %v2641 = vsel %vm2584, %v2347, %v2640
        %v2642 = vsel %vm2572, %v2355, %v2351
        %v2643 = vsel %vm2574, %v2359, %v2642
        %v2644 = vsel %vm2576, %v2363, %v2643
        %v2645 = vsel %vm2578, %v2367, %v2644
        %v2646 = vsel %vm2580, %v2371, %v2645
        %v2647 = vsel %vm2582, %v2375, %v2646
        %v2648 = vsel %vm2584, %v2379, %v2647
        %v2649 = vsel %vm2572, %v2387, %v2383
        %v2650 = vsel %vm2574, %v2391, %v2649
        %v2651 = vsel %vm2576, %v2395, %v2650
        %v2652 = vsel %vm2578, %v2399, %v2651
        %v2653 = vsel %vm2580, %v2403, %v2652
        %v2654 = vsel %vm2582, %v2407, %v2653
        %v2655 = vsel %vm2584, %v2411, %v2654
        %v2656 = vsel %vm2572, %v2419, %v2415
        %v2657 = vsel %vm2574, %v2423, %v2656
        %v2658 = vsel %vm2576, %v2427, %v2657
        %v2659 = vsel %vm2578, %v2431, %v2658
        %v2660 = vsel %vm2580, %v2435, %v2659
        %v2661 = vsel %vm2582, %v2439, %v2660
        %v2662 = vsel %vm2584, %v2443, %v2661
        %v2663 = vsel %vm2572, %v2451, %v2447
        %v2664 = vsel %vm2574, %v2455, %v2663
        %v2665 = vsel %vm2576, %v2459, %v2664
        %v2666 = vsel %vm2578, %v2463, %v2665
        %v2667 = vsel %vm2580, %v2467, %v2666
        %v2668 = vsel %vm2582, %v2471, %v2667
        %v2669 = vsel %vm2584, %v2475, %v2668
        %v2670 = vsel %vm2572, %v2483, %v2479
        %v2671 = vsel %vm2574, %v2487, %v2670
        %v2672 = vsel %vm2576, %v2491, %v2671
        %v2673 = vsel %vm2578, %v2495, %v2672
        %v2674 = vsel %vm2580, %v2499, %v2673
        %v2675 = vsel %vm2582, %v2503, %v2674
        %v2676 = vsel %vm2584, %v2507, %v2675
        %v2677 = vsel %vm2572, %v2515, %v2511
        %v2678 = vsel %vm2574, %v2519, %v2677
        %v2679 = vsel %vm2576, %v2523, %v2678
        %v2680 = vsel %vm2578, %v2527, %v2679
        %v2681 = vsel %vm2580, %v2531, %v2680
        %v2682 = vsel %vm2582, %v2535, %v2681
        %v2683 = vsel %vm2584, %v2539, %v2682
        %v2684 = vsel %vm2572, %v2547, %v2543
        %v2685 = vsel %vm2574, %v2551, %v2684
        %v2686 = vsel %vm2576, %v2555, %v2685
        %v2687 = vsel %vm2578, %v2559, %v2686
        %v2688 = vsel %vm2580, %v2563, %v2687
        %v2689 = vsel %vm2582, %v2567, %v2688
        %v2690 = vsel %vm2584, %v2571, %v2689
        %vm2691 = vcmask 64512
        %v2693 = vsel %vm2691, %v1931, 0
        %v2695 = vsel %vm2691, %v2585, 0
        %v2697 = vsel %vm2691, %v2592, 0
        %v2699 = vsel %vm2691, %v2599, 0
        %v2701 = vsel %vm2691, %v2606, 0
        %v2703 = vsel %vm2691, %v2613, 0
        %v2705 = vsel %vm2691, %v2620, 0
        %v2707 = vsel %vm2691, %v2627, 0
        %v2709 = vsel %vm2691, %v2634, 0
        %v2711 = vsel %vm2691, %v2641, 0
        %v2713 = vsel %vm2691, %v2648, 0
        %v2715 = vsel %vm2691, %v2655, 0
        %v2717 = vsel %vm2691, %v2662, 0
        %v2719 = vsel %vm2691, %v2669, 0
        %v2721 = vsel %vm2691, %v2676, 0
        %v2723 = vsel %vm2691, %v2683, 0
        %v2725 = vsel %vm2691, %v2690, 0
        %2727 = vmatprep.subr.mxu0 0.0
        %2728 = vmatpush1.xpose.msra.mxu0 %v2695
        %2729 = vmatprep.subr.mxu0 0.0
        %2730 = vmatpush1.xpose.msra.mxu0 %v2697
        %2731 = vmatprep.subr.mxu0 0.0
        %2732 = vmatpush1.xpose.msra.mxu0 %v2699
        %2733 = vmatprep.subr.mxu0 0.0
        %2734 = vmatpush1.xpose.msra.mxu0 %v2701
        %2735 = vmatprep.subr.mxu0 0.0
        %2736 = vmatpush1.xpose.msra.mxu0 %v2703
        %2737 = vmatprep.subr.mxu0 0.0
        %2738 = vmatpush1.xpose.msra.mxu0 %v2705
        %2739 = vmatprep.subr.mxu0 0.0
        %2740 = vmatpush1.xpose.msra.mxu0 %v2707
        %2741 = vmatprep.subr.mxu0 0.0
        %2742 = vmatpush1.xpose.msra.mxu0 %v2709
        %2743 = vmatprep.subr.mxu0 0.0
        %2744 = vmatpush1.xpose.msra.mxu0 %v2711
        %2745 = vmatprep.subr.mxu0 0.0
        %2746 = vmatpush1.xpose.msra.mxu0 %v2713
        %2747 = vmatprep.subr.mxu0 0.0
        %2748 = vmatpush1.xpose.msra.mxu0 %v2715
        %2749 = vmatprep.subr.mxu0 0.0
        %2750 = vmatpush1.xpose.msra.mxu0 %v2717
        %2751 = vmatprep.subr.mxu0 0.0
        %2752 = vmatpush1.xpose.msra.mxu0 %v2719
        %2753 = vmatprep.subr.mxu0 0.0
        %2754 = vmatpush1.xpose.msra.mxu0 %v2721
        %2755 = vmatprep.subr.mxu0 0.0
        %2756 = vmatpush1.xpose.msra.mxu0 %v2723
        %2757 = vmatprep.subr.mxu0 0.0
        %2758 = vmatpush1.xpose.msra.mxu0 %v2725
        %2759 = vmatprep.subr.mxu0 0.0
        %2760 = vmatpush1.xpose.msra.mxu0 0.0
        %2761 = vmatprep.subr.mxu0 0.0
        %2762 = vmatpush1.xpose.msra.mxu0 0.0
        %2763 = vmatprep.subr.mxu0 0.0
        %2764 = vmatpush1.xpose.msra.mxu0 0.0
        %2765 = vmatprep.subr.mxu0 0.0
        %2766 = vmatpush1.xpose.msra.mxu0 0.0
        %2767 = vmatprep.subr.mxu0 0.0
        %2768 = vmatpush1.xpose.msra.mxu0 0.0
        %2769 = vmatprep.subr.mxu0 0.0
        %2770 = vmatpush1.xpose.msra.mxu0 0.0
        %2771 = vmatprep.subr.mxu0 0.0
        %2772 = vmatpush1.xpose.msra.mxu0 0.0
        %2773 = vmatprep.subr.mxu0 0.0
        %2774 = vmatpush1.xpose.msra.mxu0 0.0
        %2775 = vmatprep.subr.mxu0 0.0
        %2776 = vmatpush1.xpose.msra.mxu0 0.0
        %2777 = vmatprep.subr.mxu0 0.0
        %2778 = vmatpush1.xpose.msra.mxu0 0.0
        %2779 = vmatprep.subr.mxu0 0.0
        %2780 = vmatpush1.xpose.msra.mxu0 0.0
        %2781 = vmatprep.subr.mxu0 0.0
        %2782 = vmatpush1.xpose.msra.mxu0 0.0
        %2783 = vmatprep.subr.mxu0 0.0
        %2784 = vmatpush1.xpose.msra.mxu0 0.0
        %2785 = vmatprep.subr.mxu0 0.0
        %2786 = vmatpush1.xpose.msra.mxu0 0.0
        %2787 = vmatprep.subr.mxu0 0.0
        %2788 = vmatpush1.xpose.msra.mxu0 0.0
        %2789 = vmatprep.subr.mxu0 0.0
        %2790 = vmatpush1.xpose.msra.mxu0 0.0
        %2791 = vmatprep.mubr.f32.mxu0 0.0
        %2792 = vmatmul.mubr.f32.gmra.mrb[0].mxu0 %v2693
        %v2793 = vpop.f32.mrb[0].mxu0
        %v2794 = vadd.f32 0.0, %v2793
        %v2795 = vpop.f32.mrb[0].mxu0
        %2796 = vdwg.mxu0
        %2797 = vmax.xlane.f32.xlu0 %v2794
        %v2798 = vpop.xlane.xlu0 %2797
        %v2799 = vsub.f32 %v2794, %v2798
        %v2800 = vmul.f32 %v2799, 1.442695
        %v2801 = vpow.pop %v2800
        %2802 = vadd.xlane.f32.xlu0 %v2801
        %v2803 = vpop.xlane.xlu0 %2802
        %v2804 = vrcp.pop %v2803
        %v2805 = vmul.f32 %v2803, %v2804
        %v2806 = vsub.f32 2.0, %v2805
        %v2807 = vmul.f32 %v2804, %v2806
        %v2808 = vmul.f32 %v2801, %v2807
        %2809 = vst [vmem:[%s334] sm:$0xff] %v2808
        %s2810 = sand.u32 %s171, 1
        %s2811 = scalar_lea.sflag [#allocation4], %s2810
        %s2812 = sand.u32 %s171, 1
        %s2813 = smul.addr %s2812, 8
        %s2814 = scalar_lea.vmem [#allocation10], %s2813
        // Predicated region
        $region61: #{tpu_custom_call.1} parent=43 // pred_check
          %p2815 = pneg %p181
        $region62: #{tpu_custom_call.1} parent=43 // pred_check_branch
          %2817 = sbr.rel (%p2815) target = $region64
        $region63: #{tpu_custom_call.1} parent=43 // pred_region
          %s2819 = ssub.s32 128, 128
          %2820 = vsyncadd %s2811, %s2819
          %s2821 = smul.addr %s27, 128
          %s2822 = scalar_lea.hbm %s6, %s2821
          %s2824 = sshll.u32 %s2814, 4
          %s2825 = int_to_ptr.vmem [resolvable:$true] %s2824
          %2827 = dma.vmem_to_hbm [thread:$0]  %s2825, 128, %s2822, %s2811
        $region64: #{tpu_custom_call.1} parent=43 // pred_fallthru
          _
      $region44: #{tpu_custom_call.1} parent=5 // pred_fallthru
        _
      %p2828 = scmp.le.s32.totalorder 2, %s22
      // Predicated region
      $region65: #{tpu_custom_call.1} parent=5 // pred_check
        %p2829 = pneg %p2828
      $region66: #{tpu_custom_call.1} parent=5 // pred_check_branch
        %2831 = sbr.rel (%p2829) target = $region68
      $region67: #{tpu_custom_call.1} parent=5 // pred_region
        %s2832 = ssub.s32 %s22, 2
        // Predicated region
        $region69: #{tpu_custom_call.1} parent=67 // pred_check
          %p2833 = pneg %p187
        $region70: #{tpu_custom_call.1} parent=67 // pred_check_branch
          %2835 = sbr.rel (%p2833) target = $region72
        $region71: #{tpu_custom_call.1} parent=67 // pred_region
          %s2836 = sand.u32 %s172, 1
          %s2837 = scalar_lea.sflag [#allocation4], %s2836
          %s2838 = sand.u32 %s172, 1
          %s2839 = smul.addr %s2838, 8
          %s2840 = scalar_lea.vmem [#allocation10], %s2839
          %2841 = dma.done %s2837, 128
        $region72: #{tpu_custom_call.1} parent=67 // pred_fallthru
          _
      $region68: #{tpu_custom_call.1} parent=5 // pred_fallthru
        _
    $region6: #{tpu_custom_call.1} parent=1 // loop_footer
      %s26 = sadd.s32 1, %s22
    $region7: #{tpu_custom_call.1} parent=1 // loop_footer_branch
      %21 = sbr.rel target = $region3
    $region8: #{tpu_custom_call.1} parent=1 // loop_exit
      _
    %2842 = vsyncpa [#allocation3], 1
    %s2843 = scalar_lea.sflag [#allocation3], 1
    %2844 = vsyncpa %s2843, 1
    %2845 = vsyncpa [#allocation6], 1
    %s2846 = scalar_lea.sflag [#allocation6], 1
    %2847 = vsyncpa %s2846, 1
    %2848 = vsyncpa [#allocation9], 1
    %2849 = vsyncpa [#allocation4], 1
    %s2850 = scalar_lea.sflag [#allocation4], 1
    %2851 = vsyncpa %s2850, 1

</llo_original>
